<compile_context>
chip_gen: v6e
topology: v6e:2x2x1
jax: 0.10.0
libtpu: 0.0.40
codegen_flags: <defaults>
</compile_context>

<pallas_src>
import functools
import math

import jax
import jax.numpy as jnp
import numpy as np
from jax.experimental import pallas as pl
from jax.experimental.pallas import tpu as pltpu


def _round_up(x, m):
    return (x + m - 1) // m * m


def _vmem_capacity_bytes():
    """Physical VMEM per core (128 MiB on v5e/v6e, 64 MiB on v7x)."""
    try:
        return int(pltpu.get_tpu_info().vmem_capacity_bytes)
    except Exception:
        return 64 * 2 ** 20  # conservative (v7x-sized) fallback


def _bilinear_head_kernel(x1_ref, x2_ref, wflat_ref, b1_ref, wo_ref, b2_ref,
                          out_ref, acc_ref, oflat_ref):
    """One (batch-tile i, inner-dim-tile k) grid step.

    x1_ref: (BM, D1) f32        x2_ref: (BM, D2) f32
    wflat_ref: (D1*D2, BK) bf16 b1_ref: (1, BK) f32
    wo_ref: (BK, C_pad) bf16    b2_ref: (1, C_pad) f32
    out_ref: (BM, C_pad)
    acc_ref:   (BM, C_pad) f32 scratch   -- logits accumulator over K tiles
    oflat_ref: (BM, D1*D2) bf16 scratch  -- cached flattened outer product
    """
    kk = pl.program_id(1)

    @pl.when(kk == 0)
    def _init():
        acc_ref[...] = jnp.zeros_like(acc_ref)
        # Lane-dense flattened per-example outer product:
        #   o_flat[b, i*D2 + j] = x1[b, i] * x2[b, j]
        # Depends only on the batch tile -> built once here and cached; the
        # product is computed in f32 and packed to bf16 for the MXU.
        x1 = x1_ref[...].astype(jnp.float32)
        x2 = x2_ref[...].astype(jnp.float32)
        d1 = x1.shape[1]
        d2 = x2.shape[1]
        o_flat = jnp.repeat(x1, d2, axis=1) * jnp.tile(x2, (1, d1))
        oflat_ref[...] = o_flat.astype(jnp.bfloat16)

    # Bilinear slab for this K tile: (BM, D1*D2) @ (D1*D2, BK) -> f32.
    h = jnp.dot(oflat_ref[...], wflat_ref[...],
                preferred_element_type=jnp.float32)
    h = jnp.tanh(h + b1_ref[...])                      # (BM, BK), f32

    # Output projection, accumulated across K tiles.
    acc_ref[...] += jnp.dot(h.astype(jnp.bfloat16), wo_ref[...],
                            preferred_element_type=jnp.float32)

    @pl.when(kk == pl.num_programs(1) - 1)
    def _finalize():
        out_ref[...] = (acc_ref[...] + b2_ref[...]).astype(out_ref.dtype)


def prepare_params(w_bil, b_bil, w_out, b_out, *, block_k=None):
    """One-time weight prep (hoisted out of the per-call forward path).

    w_bil: (K, D1, D2), b_bil: (K,)  -- nn.Bilinear params
    w_out: (C, K),      b_out: (C,)  -- nn.Linear params
    Returns (w_flat_bf16, b1, wo_t_bf16, b2, block_k) with K padded to a
    multiple of block_k and C padded to a multiple of 128.  Zero padding is
    exact: padded K columns give tanh(0 + 0) = 0 against zero wo_t rows, and
    padded class columns are sliced off by the wrapper.
    """
    K, D1, D2 = w_bil.shape
    C = w_out.shape[0]
    if block_k is None:
        # Smaller K tile on 64-MiB-VMEM chips (v7x), larger on v5e/v6e.
        block_k = 512 if _vmem_capacity_bytes() > 96 * 2 ** 20 else 256
    block_k = min(block_k, _round_up(K, 128))
    K_pad = _round_up(K, block_k)
    C_pad = _round_up(C, 128)

    # Flatten bilinear weight: w_flat[i*D2 + j, k] = W[k, i, j].
    w_flat = jnp.transpose(w_bil, (1, 2, 0)).reshape(D1 * D2, K)
    w_flat = jnp.pad(w_flat, ((0, 0), (0, K_pad - K))).astype(jnp.bfloat16)
    b1 = jnp.pad(b_bil, (0, K_pad - K)).reshape(1, K_pad).astype(jnp.float32)
    wo_t = jnp.pad(w_out.T, ((0, K_pad - K), (0, C_pad - C))).astype(jnp.bfloat16)
    b2 = jnp.pad(b_out, (0, C_pad - C)).reshape(1, C_pad).astype(jnp.float32)
    return w_flat, b1, wo_t, b2, block_k


@functools.partial(jax.jit, static_argnames=("num_classes", "block_b", "block_k"))
def bilinear_classification_head(x1, x2, w_flat, b1, wo_t, b2, *,
                                 num_classes, block_b=None, block_k=None):
    """Eval-mode forward.  x1: (B, D1), x2: (B, D2) -> logits (B, num_classes)."""
    B, D1 = x1.shape
    _, D2 = x2.shape
    DD, K_pad = w_flat.shape
    C_pad = wo_t.shape[1]
    assert DD == D1 * D2
    assert K_pad % 128 == 0 and C_pad % 128 == 0

    cap = _vmem_capacity_bytes()
    # Always set the scoped-VMEM ceiling (v5e's default is only 16 MiB):
    # ~96 MiB on 128-MiB chips (v5e/v6e), 48 MiB on 64-MiB chips (v7x).
    vmem_limit = min(int(0.75 * cap), 100 * 2 ** 20)

    # K tile: 512 on 128-MiB chips, 256 on v7x; must divide K_pad.
    if block_k is None:
        block_k = 512 if cap > 96 * 2 ** 20 else 256
    block_k = min(block_k, K_pad)
    if K_pad % block_k:
        block_k = math.gcd(K_pad, block_k)
    assert K_pad % block_k == 0

    # Per-step VMEM footprint (counts the f32 repeat/tile temporaries too).
    def per_step_bytes(bb):
        return (bb * DD * 2                 # bf16 o_flat scratch (cached)
                + 3 * bb * DD * 4           # f32 repeat/tile/product temporaries
                + bb * C_pad * 4            # f32 logits accumulator
                + 2 * DD * block_k * 2      # bf16 w_flat tile (double buffered)
                + 2 * block_k * C_pad * 2   # bf16 wo_t tile (double buffered)
                + 2 * bb * (D1 + D2) * 4    # x1/x2 tiles
                + 2 * bb * C_pad * 4        # output tile
                + 2 * (block_k + C_pad) * 4)

    # Batch tile: large enough to leave the weight-streaming HBM roofline
    # (intensity of the first matmul ~= block_b flop/byte), clamped by batch
    # size and the VMEM-fit check above.
    target_b = 512 if cap > 96 * 2 ** 20 else 256
    if block_b is None:
        block_b = target_b
    block_b = _round_up(min(block_b, _round_up(B, 8)), 8)
    while block_b > 8 and per_step_bytes(block_b) > vmem_limit:
        block_b = _round_up(block_b // 2, 8)

    # v7x (2 TCs, 64-MiB VMEM): prefer n_b >= 2 so the "parallel" batch axis
    # spans both TensorCores once the batch is big enough.
    if cap <= 64 * 2 ** 20 and B >= 256 and _round_up(B, block_b) == block_b:
        block_b = _round_up(pl.cdiv(B, 2), 8)

    # Pad batch to a multiple of the batch tile (no divisibility requirement).
    B_pad = _round_up(B, block_b)
    if B_pad != B:
        x1 = jnp.pad(x1, ((0, B_pad - B), (0, 0)))
        x2 = jnp.pad(x2, ((0, B_pad - B), (0, 0)))

    n_b = B_pad // block_b
    n_k = K_pad // block_k

    # Weight blocks are re-streamed once per batch tile when n_k > 1 (k is the
    # inner grid axis); they stream exactly once when n_b == 1 or n_k == 1.
    weight_fetch = n_b if n_k > 1 else 1
    weight_bytes = (DD * K_pad + K_pad * C_pad) * 2 + (K_pad + C_pad) * 4
    cost = pl.CostEstimate(
        flops=2 * B_pad * DD * K_pad + 2 * B_pad * K_pad * C_pad + B_pad * DD,
        transcendentals=B_pad * K_pad,
        bytes_accessed=(B_pad * (D1 + D2) * 4          # x1/x2, once per batch tile
                        + weight_fetch * weight_bytes  # streamed weights
                        + B_pad * C_pad * 4),          # logits
    )

    out = pl.pallas_call(
        _bilinear_head_kernel,
        out_shape=jax.ShapeDtypeStruct((B_pad, C_pad), x1.dtype),
        grid_spec=pltpu.PrefetchScalarGridSpec(
            num_scalar_prefetch=0,
            grid=(n_b, n_k),
            in_specs=[
                pl.BlockSpec((block_b, D1), lambda i, k: (i, 0)),
                pl.BlockSpec((block_b, D2), lambda i, k: (i, 0)),
                pl.BlockSpec((DD, block_k), lambda i, k: (0, k)),
                pl.BlockSpec((1, block_k), lambda i, k: (0, k)),
                pl.BlockSpec((block_k, C_pad), lambda i, k: (k, 0)),
                pl.BlockSpec((1, C_pad), lambda i, k: (0, 0)),
            ],
            out_specs=pl.BlockSpec((block_b, C_pad), lambda i, k: (i, 0)),
            scratch_shapes=[pltpu.VMEM((block_b, C_pad), jnp.float32),
                            pltpu.VMEM((block_b, DD), jnp.bfloat16)],
        ),
        compiler_params=pltpu.CompilerParams(
            dimension_semantics=("parallel", "arbitrary"),
            vmem_limit_bytes=vmem_limit),
        cost_estimate=cost,
    )(x1, x2, w_flat, b1, wo_t, b2)

    return out[:B, :num_classes]


def _reference(x1, x2, w_bil, b_bil, w_out, b_out):
    h = jnp.einsum("bi,kij,bj->bk", x1, w_bil, x2) + b_bil
    h = jnp.tanh(h)
    return h @ w_out.T + b_out


if __name__ == "__main__":
    # Small shapes consistent with the module: input_dim1 = input_dim2 = 32,
    # inner_dim = 128, num_classes = 19, batch = 12 (exercises batch padding).
    B, D1, D2, K, C = 12, 32, 32, 128, 19
    key = jax.random.PRNGKey(0)
    k1, k2, k3, k4, k5, k6 = jax.random.split(key, 6)

    x1 = jax.random.normal(k1, (B, D1), dtype=jnp.float32)
    x2 = jax.random.normal(k2, (B, D2), dtype=jnp.float32)

    # PyTorch-style init bounds (uniform(-1/sqrt(fan_in), 1/sqrt(fan_in))).
    bnd_bil = 1.0 / np.sqrt(D1)
    w_bil = jax.random.uniform(k3, (K, D1, D2), jnp.float32, -bnd_bil, bnd_bil)
    b_bil = jax.random.uniform(k4, (K,), jnp.float32, -bnd_bil, bnd_bil)
    bnd_out = 1.0 / np.sqrt(K)
    w_out = jax.random.uniform(k5, (C, K), jnp.float32, -bnd_out, bnd_out)
    b_out = jax.random.uniform(k6, (C,), jnp.float32, -bnd_out, bnd_out)

    # One-time weight prep (flatten / pad / bf16) — outside the per-call path.
    w_flat, b1, wo_t, b2, block_k = prepare_params(w_bil, b_bil, w_out, b_out)

    out = bilinear_classification_head(x1, x2, w_flat, b1, wo_t, b2,
                                       num_classes=C, block_k=block_k)
    out = jax.block_until_ready(out)
    assert out.shape == (B, C)

    ref = jax.block_until_ready(_reference(x1, x2, w_bil, b_bil, w_out, b_out))
    # bf16 MXU operands with f32 accumulation: tolerance widened vs pure f32.
    np.testing.assert_allclose(np.asarray(out), np.asarray(ref), rtol=2e-2, atol=2e-2)

    print("KERNEL_OK")
</pallas_src>

<mosaic_0001>
module attributes {stable_mosaic.version = 11 : i64} {
  func.func @_bilinear_head_kernel(%arg0: i32, %arg1: i32, %arg2: memref<16x32xf32, #tpu.memory_space<vmem>>, %arg3: memref<16x32xf32, #tpu.memory_space<vmem>>, %arg4: memref<1024x128xbf16, #tpu.memory_space<vmem>>, %arg5: memref<1x128xf32, #tpu.memory_space<vmem>>, %arg6: memref<128x128xbf16, #tpu.memory_space<vmem>>, %arg7: memref<1x128xf32, #tpu.memory_space<vmem>>, %arg8: memref<16x128xf32, #tpu.memory_space<vmem>>, %arg9: memref<16x128xf32, #tpu.memory_space<vmem>>, %arg10: memref<16x1024xbf16, #tpu.memory_space<vmem>>) attributes {dimension_semantics = [#tpu.dimension_semantics<parallel>, #tpu.dimension_semantics<arbitrary>], iteration_bounds = array<i64: 1, 1>, scalar_prefetch = 0 : i64, scratch_operands = 2 : i64, tpu.core_type = #tpu.core_type<tc>, window_params = [{transform_indices = @transform_0, window_bounds = array<i64: 16, 32>}, {transform_indices = @transform_1, window_bounds = array<i64: 16, 32>}, {transform_indices = @transform_2, window_bounds = array<i64: 1024, 128>}, {transform_indices = @transform_3, window_bounds = array<i64: 1, 128>}, {transform_indices = @transform_4, window_bounds = array<i64: 128, 128>}, {pipeline_mode = #tpu.pipeline_mode<synchronous>, transform_indices = @transform_5, window_bounds = array<i64: 1, 128>}, {transform_indices = @transform_6, window_bounds = array<i64: 16, 128>}]} {
    %c0_i32 = arith.constant 0 : i32
    %0 = arith.cmpi eq, %arg1, %c0_i32 : i32
    %1 = arith.extui %0 : i1 to i32
    %c0_i32_0 = arith.constant 0 : i32
    %2 = arith.cmpi ne, %1, %c0_i32_0 : i32
    scf.if %2 {
      %cst_15 = arith.constant 0.000000e+00 : f32
      %19 = vector.broadcast %cst_15 : f32 to vector<16x128xf32>
      %c0_16 = arith.constant 0 : index
      %c0_17 = arith.constant 0 : index
      %20 = vector.load %arg9[%c0_16, %c0_17] : memref<16x128xf32, #tpu.memory_space<vmem>>, vector<16x128xf32>
      tpu.vector_store %arg9[%c0_16, %c0_17], %19 {strides = array<i32>} : memref<16x128xf32, #tpu.memory_space<vmem>>, vector<16x128xf32>,
      %c0_18 = arith.constant 0 : index
      %c0_19 = arith.constant 0 : index
      %21 = vector.load %arg2[%c0_18, %c0_19] : memref<16x32xf32, #tpu.memory_space<vmem>>, vector<16x32xf32>
      %c0_20 = arith.constant 0 : index
      %c0_21 = arith.constant 0 : index
      %22 = vector.load %arg3[%c0_20, %c0_21] : memref<16x32xf32, #tpu.memory_space<vmem>>, vector<16x32xf32>
      %23 = vector.shape_cast %21 : vector<16x32xf32> to vector<16x32x1xf32>
      %24 = vector.broadcast %23 : vector<16x32x1xf32> to vector<16x32x32xf32>
      %25 = vector.shape_cast %24 : vector<16x32x32xf32> to vector<16x1024xf32>
      %26 = tpu.concatenate %22, %22, %22, %22, %22, %22, %22, %22, %22, %22, %22, %22, %22, %22, %22, %22, %22, %22, %22, %22, %22, %22, %22, %22, %22, %22, %22, %22, %22, %22, %22, %22 in 1 : vector<16x32xf32>, vector<16x32xf32>, vector<16x32xf32>, vector<16x32xf32>, vector<16x32xf32>, vector<16x32xf32>, vector<16x32xf32>, vector<16x32xf32>, vector<16x32xf32>, vector<16x32xf32>, vector<16x32xf32>, vector<16x32xf32>, vector<16x32xf32>, vector<16x32xf32>, vector<16x32xf32>, vector<16x32xf32>, vector<16x32xf32>, vector<16x32xf32>, vector<16x32xf32>, vector<16x32xf32>, vector<16x32xf32>, vector<16x32xf32>, vector<16x32xf32>, vector<16x32xf32>, vector<16x32xf32>, vector<16x32xf32>, vector<16x32xf32>, vector<16x32xf32>, vector<16x32xf32>, vector<16x32xf32>, vector<16x32xf32>, vector<16x32xf32> -> vector<16x1024xf32>
      %27 = arith.mulf %25, %26 : vector<16x1024xf32>
      %28 = arith.truncf %27 : vector<16x1024xf32> to vector<16x1024xbf16>
      %c0_22 = arith.constant 0 : index
      %c0_23 = arith.constant 0 : index
      %29 = vector.load %arg10[%c0_22, %c0_23] : memref<16x1024xbf16, #tpu.memory_space<vmem>>, vector<16x1024xbf16>
      tpu.vector_store %arg10[%c0_22, %c0_23], %28 {strides = array<i32>} : memref<16x1024xbf16, #tpu.memory_space<vmem>>, vector<16x1024xbf16>,
    } else {
    }
    %c0 = arith.constant 0 : index
    %c0_1 = arith.constant 0 : index
    %3 = vector.load %arg10[%c0, %c0_1] : memref<16x1024xbf16, #tpu.memory_space<vmem>>, vector<16x1024xbf16>
    %c0_2 = arith.constant 0 : index
    %c0_3 = arith.constant 0 : index
    %4 = vector.load %arg4[%c0_2, %c0_3] : memref<1024x128xbf16, #tpu.memory_space<vmem>>, vector<1024x128xbf16>
    %cst = arith.constant dense<0.000000e+00> : vector<16x128xf32>
    %5 = tpu.matmul %3, %4, %cst {dimension_numbers = #tpu.dot_dimension_numbers<[1], [0], [0], [1], [0, 0, 1, 1], [], []>} : vector<16x1024xbf16>, vector<1024x128xbf16>, vector<16x128xf32> -> vector<16x128xf32>
    %c0_4 = arith.constant 0 : index
    %c0_5 = arith.constant 0 : index
    %6 = vector.load %arg5[%c0_4, %c0_5] : memref<1x128xf32, #tpu.memory_space<vmem>>, vector<1x128xf32>
    %7 = vector.broadcast %6 : vector<1x128xf32> to vector<16x128xf32>
    %8 = arith.addf %5, %7 : vector<16x128xf32>
    %9 = math.tanh %8 : vector<16x128xf32>
    %c0_6 = arith.constant 0 : index
    %c0_7 = arith.constant 0 : index
    %10 = vector.load %arg9[%c0_6, %c0_7] : memref<16x128xf32, #tpu.memory_space<vmem>>, vector<16x128xf32>
    %11 = arith.truncf %9 : vector<16x128xf32> to vector<16x128xbf16>
    %c0_8 = arith.constant 0 : index
    %c0_9 = arith.constant 0 : index
    %12 = vector.load %arg6[%c0_8, %c0_9] : memref<128x128xbf16, #tpu.memory_space<vmem>>, vector<128x128xbf16>
    %cst_10 = arith.constant dense<0.000000e+00> : vector<16x128xf32>
    %13 = tpu.matmul %11, %12, %cst_10 {dimension_numbers = #tpu.dot_dimension_numbers<[1], [0], [0], [1], [0, 0, 1, 1], [], []>} : vector<16x128xbf16>, vector<128x128xbf16>, vector<16x128xf32> -> vector<16x128xf32>
    %14 = arith.addf %10, %13 : vector<16x128xf32>
    %c0_11 = arith.constant 0 : index
    %c0_12 = arith.constant 0 : index
    %15 = vector.load %arg9[%c0_11, %c0_12] : memref<16x128xf32, #tpu.memory_space<vmem>>, vector<16x128xf32>
    tpu.vector_store %arg9[%c0_11, %c0_12], %14 {strides = array<i32>} : memref<16x128xf32, #tpu.memory_space<vmem>>, vector<16x128xf32>,
    %c0_i32_13 = arith.constant 0 : i32
    %16 = arith.cmpi eq, %arg1, %c0_i32_13 : i32
    %17 = arith.extui %16 : i1 to i32
    %c0_i32_14 = arith.constant 0 : i32
    %18 = arith.cmpi ne, %17, %c0_i32_14 : i32
    scf.if %18 {
      %c0_15 = arith.constant 0 : index
      %c0_16 = arith.constant 0 : index
      %19 = vector.load %arg9[%c0_15, %c0_16] : memref<16x128xf32, #tpu.memory_space<vmem>>, vector<16x128xf32>
      %c0_17 = arith.constant 0 : index
      %c0_18 = arith.constant 0 : index
      %20 = vector.load %arg7[%c0_17, %c0_18] : memref<1x128xf32, #tpu.memory_space<vmem>>, vector<1x128xf32>
      %21 = vector.broadcast %20 : vector<1x128xf32> to vector<16x128xf32>
      %22 = arith.addf %19, %21 : vector<16x128xf32>
      %c0_19 = arith.constant 0 : index
      %c0_20 = arith.constant 0 : index
      %23 = vector.load %arg8[%c0_19, %c0_20] : memref<16x128xf32, #tpu.memory_space<vmem>>, vector<16x128xf32>
      tpu.vector_store %arg8[%c0_19, %c0_20], %22 {strides = array<i32>} : memref<16x128xf32, #tpu.memory_space<vmem>>, vector<16x128xf32>,
    } else {
    }
    return
  }
  func.func @transform_0(%arg0: i32, %arg1: i32) -> (i32, i32) {
    %c0_i32 = arith.constant 0 : i32
    %c0_i32_0 = arith.constant 0 : i32
    return %arg0, %c0_i32 : i32, i32
  }
  func.func @transform_1(%arg0: i32, %arg1: i32) -> (i32, i32) {
    %c0_i32 = arith.constant 0 : i32
    %c0_i32_0 = arith.constant 0 : i32
    return %arg0, %c0_i32 : i32, i32
  }
  func.func @transform_2(%arg0: i32, %arg1: i32) -> (i32, i32) {
    %c0_i32 = arith.constant 0 : i32
    %c0_i32_0 = arith.constant 0 : i32
    return %c0_i32, %arg1 : i32, i32
  }
  func.func @transform_3(%arg0: i32, %arg1: i32) -> (i32, i32) {
    %c0_i32 = arith.constant 0 : i32
    %c0_i32_0 = arith.constant 0 : i32
    return %c0_i32, %arg1 : i32, i32
  }
  func.func @transform_4(%arg0: i32, %arg1: i32) -> (i32, i32) {
    %c0_i32 = arith.constant 0 : i32
    %c0_i32_0 = arith.constant 0 : i32
    return %arg1, %c0_i32 : i32, i32
  }
  func.func @transform_5(%arg0: i32, %arg1: i32) -> (i32, i32) {
    %c0_i32 = arith.constant 0 : i32
    %c0_i32_0 = arith.constant 0 : i32
    %c0_i32_1 = arith.constant 0 : i32
    return %c0_i32, %c0_i32_0 : i32, i32
  }
  func.func @transform_6(%arg0: i32, %arg1: i32) -> (i32, i32) {
    %c0_i32 = arith.constant 0 : i32
    %c0_i32_0 = arith.constant 0 : i32
    return %arg0, %c0_i32 : i32, i32
  }
}

</mosaic_0001>

<llo_original>
// kernel: bilinear_classification_head.1
$region0: #{bilinear_classification_head.1}
  #allocation0 [shape = 'u32[]', space=smem, size = 0x4, offset = 0x4, fixed_abs, tag = 'smem constant byte address 0x4 - core index']
  #allocation1 [shape = 'u32[144,128]{1,0:T(1,128)}', space=vmem, size = 0x12000, scoped, tag = 'internal scratch']
  #allocation2 [shape = 'f32[16,128]{1,0:T(8,128)}', space=vmem, size = 0x2000, scoped, tag = 'scratch operand']
  #allocation3 [shape = 'bf16[16,1024]{1,0:T(8,128)(2,1)}', space=vmem, size = 0x8000, scoped, tag = 'scratch operand']
  %s0 = inlined_call_operand.vmem [shape: f32[16,32], index: 0, kind: input, shape index: {}]
  %s1 = inlined_call_operand.vmem [shape: f32[16,32], index: 1, kind: input, shape index: {}]
  %s2 = inlined_call_operand.hbm [shape: bf16[1024,128], index: 2, kind: input, shape index: {}]
  %s3 = inlined_call_operand.vmem [shape: f32[1,128], index: 3, kind: input, shape index: {}]
  %s4 = inlined_call_operand.vmem [shape: bf16[128,128], index: 4, kind: input, shape index: {}]
  %s5 = inlined_call_operand.vmem [shape: f32[1,128], index: 5, kind: input, shape index: {}]
  %s6 = inlined_call_operand.hbm [shape: f32[16,128], index: 6, kind: output, shape index: {}]
  %s7 = sld [smem:[#allocation0]]
  $region46: #{bilinear_classification_head.1} parent=0
    _
  %s9 = ssub.s32 1, %s7
  %s10 = scalar_select 0, %s9, %s7
  $region1: #{bilinear_classification_head.1} parent=0
    #allocation4 [shape = 'u8[262144]{0}', space=vmem, size = 0x40000, scoped, tag = 'input window, operand 2, single buffered']
    #allocation5 [shape = 's32[1]{0}', space=sflag, size = 0x4, scoped, tag = 'scoped memory for bilinear_classification_head.1']
    #allocation6 [shape = 's32[1]{0}', space=sflag, size = 0x4, scoped, tag = 'scoped memory for bilinear_classification_head.1']
    #allocation7 [shape = 'u8[8192]{0}', space=vmem, size = 0x2000, scoped, tag = 'output window, operand 0, single buffered']
    %11 = vsyncpa [#allocation5], 0
    %12 = vsyncpa [#allocation6], 0
    // Predicated region
    $region2: #{bilinear_classification_head.1} parent=1 // pred_check
      _
    $region3: #{bilinear_classification_head.1} parent=1 // pred_check_branch
      %14 = sbr.rel (0) target = $region5
    $region4: #{bilinear_classification_head.1} parent=1 // pred_region
      _
    $region5: #{bilinear_classification_head.1} parent=1 // pred_fallthru
      _
    // Predicated region
    $region6: #{bilinear_classification_head.1} parent=1 // pred_check
      _
    $region7: #{bilinear_classification_head.1} parent=1 // pred_check_branch
      %16 = sbr.rel (0) target = $region9
    $region8: #{bilinear_classification_head.1} parent=1 // pred_region
      _
    $region9: #{bilinear_classification_head.1} parent=1 // pred_fallthru
      _
    // Predicated region
    $region10: #{bilinear_classification_head.1} parent=1 // pred_check
      _
    $region11: #{bilinear_classification_head.1} parent=1 // pred_check_branch
      %18 = sbr.rel (0) target = $region13
    $region12: #{bilinear_classification_head.1} parent=1 // pred_region
      %s20 = ssub.s32 8192, 8192
      %21 = vsyncadd [#allocation5], %s20
      %s22 = sshll.u32 [#allocation4], 4
      %s23 = int_to_ptr.vmem [resolvable:$true] %s22
      %28 = dma.hbm_to_vmem [thread:$0]  %s2, 8192, %s23, [#allocation5], 64, 64, 4
    $region13: #{bilinear_classification_head.1} parent=1 // pred_fallthru
      _
    // Predicated region
    $region14: #{bilinear_classification_head.1} parent=1 // pred_check
      _
    $region15: #{bilinear_classification_head.1} parent=1 // pred_check_branch
      %30 = sbr.rel (0) target = $region17
    $region16: #{bilinear_classification_head.1} parent=1 // pred_region
      _
    $region17: #{bilinear_classification_head.1} parent=1 // pred_fallthru
      _
    // Predicated region
    $region18: #{bilinear_classification_head.1} parent=1 // pred_check
      _
    $region19: #{bilinear_classification_head.1} parent=1 // pred_check_branch
      %32 = sbr.rel (0) target = $region21
    $region20: #{bilinear_classification_head.1} parent=1 // pred_region
      _
    $region21: #{bilinear_classification_head.1} parent=1 // pred_fallthru
      _
    // Predicated region
    $region22: #{bilinear_classification_head.1} parent=1 // pred_check
      _
    $region23: #{bilinear_classification_head.1} parent=1 // pred_check_branch
      %34 = sbr.rel (0) target = $region25
    $region24: #{bilinear_classification_head.1} parent=1 // pred_region
      _
    $region25: #{bilinear_classification_head.1} parent=1 // pred_fallthru
      _
    // Predicated region
    $region26: #{bilinear_classification_head.1} parent=1 // pred_check
      _
    $region27: #{bilinear_classification_head.1} parent=1 // pred_check_branch
      %36 = sbr.rel (0) target = $region29
    $region28: #{bilinear_classification_head.1} parent=1 // pred_region
      %37 = dma.done [#allocation5], 8192
    $region29: #{bilinear_classification_head.1} parent=1 // pred_fallthru
      _
    %p39 = scmp.eq.s32.totalorder 0, 0
    // Predicated region
    $region30: #{bilinear_classification_head.1} parent=1 // pred_check
      %p40 = pneg %p39
    $region31: #{bilinear_classification_head.1} parent=1 // pred_check_branch
      %42 = sbr.rel (%p40) target = $region33
    $region32: #{bilinear_classification_head.1} parent=1 // pred_region
      %43 = vst [vmem:[#allocation2] sm:$0xff] 0.0
      %44 = vst [vmem:[#allocation2 + $0x8] sm:$0xff] 0.0
      %v45 = vld [vmem:[%s0] sm:$0xff]
      %v46 = vld [vmem:[%s0 + $0x8] sm:$0xff]
      %v47 = vld [vmem:[%s1] sm:$0xff]
      %v48 = vld [vmem:[%s1 + $0x8] sm:$0xff]
      %v49 = vlaneseq
      %v50 = vshrl.u32 %v49, 7
      %v51 = vsub.s32 0, %v50
      %v52 = vrot.slane %v45, %v51
      %54 = vbcast.lane.b32.xlu0 %v52, 256
      %v55 = vpop.permute.xlu0 %54
      %s57 = sor.u32 256, 8
      %58 = vbcast.lane.b32.xlu0 %v52, %s57
      %v59 = vpop.permute.xlu0 %58
      %s61 = sor.u32 256, 16
      %62 = vbcast.lane.b32.xlu0 %v52, %s61
      %v63 = vpop.permute.xlu0 %62
      %s65 = sor.u32 256, 24
      %66 = vbcast.lane.b32.xlu0 %v52, %s65
      %v67 = vpop.permute.xlu0 %66
      %v68 = vlaneseq
      %v69 = vshrl.u32 %v68, 7
      %v70 = vsub.s32 1, %v69
      %v71 = vrot.slane %v45, %v70
      %73 = vbcast.lane.b32.xlu0 %v71, 256
      %v74 = vpop.permute.xlu0 %73
      %s76 = sor.u32 256, 8
      %77 = vbcast.lane.b32.xlu0 %v71, %s76
      %v78 = vpop.permute.xlu0 %77
      %s80 = sor.u32 256, 16
      %81 = vbcast.lane.b32.xlu0 %v71, %s80
      %v82 = vpop.permute.xlu0 %81
      %s84 = sor.u32 256, 24
      %85 = vbcast.lane.b32.xlu0 %v71, %s84
      %v86 = vpop.permute.xlu0 %85
      %v87 = vlaneseq
      %v88 = vshrl.u32 %v87, 7
      %v89 = vsub.s32 2, %v88
      %v90 = vrot.slane %v45, %v89
      %92 = vbcast.lane.b32.xlu0 %v90, 256
      %v93 = vpop.permute.xlu0 %92
      %s95 = sor.u32 256, 8
      %96 = vbcast.lane.b32.xlu0 %v90, %s95
      %v97 = vpop.permute.xlu0 %96
      %s99 = sor.u32 256, 16
      %100 = vbcast.lane.b32.xlu0 %v90, %s99
      %v101 = vpop.permute.xlu0 %100
      %s103 = sor.u32 256, 24
      %104 = vbcast.lane.b32.xlu0 %v90, %s103
      %v105 = vpop.permute.xlu0 %104
      %v106 = vlaneseq
      %v107 = vshrl.u32 %v106, 7
      %v108 = vsub.s32 3, %v107
      %v109 = vrot.slane %v45, %v108
      %111 = vbcast.lane.b32.xlu0 %v109, 256
      %v112 = vpop.permute.xlu0 %111
      %s114 = sor.u32 256, 8
      %115 = vbcast.lane.b32.xlu0 %v109, %s114
      %v116 = vpop.permute.xlu0 %115
      %s118 = sor.u32 256, 16
      %119 = vbcast.lane.b32.xlu0 %v109, %s118
      %v120 = vpop.permute.xlu0 %119
      %s122 = sor.u32 256, 24
      %123 = vbcast.lane.b32.xlu0 %v109, %s122
      %v124 = vpop.permute.xlu0 %123
      %v125 = vlaneseq
      %v126 = vshrl.u32 %v125, 7
      %v127 = vsub.s32 4, %v126
      %v128 = vrot.slane %v45, %v127
      %130 = vbcast.lane.b32.xlu0 %v128, 256
      %v131 = vpop.permute.xlu0 %130
      %s133 = sor.u32 256, 8
      %134 = vbcast.lane.b32.xlu0 %v128, %s133
      %v135 = vpop.permute.xlu0 %134
      %s137 = sor.u32 256, 16
      %138 = vbcast.lane.b32.xlu0 %v128, %s137
      %v139 = vpop.permute.xlu0 %138
      %s141 = sor.u32 256, 24
      %142 = vbcast.lane.b32.xlu0 %v128, %s141
      %v143 = vpop.permute.xlu0 %142
      %v144 = vlaneseq
      %v145 = vshrl.u32 %v144, 7
      %v146 = vsub.s32 5, %v145
      %v147 = vrot.slane %v45, %v146
      %149 = vbcast.lane.b32.xlu0 %v147, 256
      %v150 = vpop.permute.xlu0 %149
      %s152 = sor.u32 256, 8
      %153 = vbcast.lane.b32.xlu0 %v147, %s152
      %v154 = vpop.permute.xlu0 %153
      %s156 = sor.u32 256, 16
      %157 = vbcast.lane.b32.xlu0 %v147, %s156
      %v158 = vpop.permute.xlu0 %157
      %s160 = sor.u32 256, 24
      %161 = vbcast.lane.b32.xlu0 %v147, %s160
      %v162 = vpop.permute.xlu0 %161
      %v163 = vlaneseq
      %v164 = vshrl.u32 %v163, 7
      %v165 = vsub.s32 6, %v164
      %v166 = vrot.slane %v45, %v165
      %168 = vbcast.lane.b32.xlu0 %v166, 256
      %v169 = vpop.permute.xlu0 %168
      %s171 = sor.u32 256, 8
      %172 = vbcast.lane.b32.xlu0 %v166, %s171
      %v173 = vpop.permute.xlu0 %172
      %s175 = sor.u32 256, 16
      %176 = vbcast.lane.b32.xlu0 %v166, %s175
      %v177 = vpop.permute.xlu0 %176
      %s179 = sor.u32 256, 24
      %180 = vbcast.lane.b32.xlu0 %v166, %s179
      %v181 = vpop.permute.xlu0 %180
      %v182 = vlaneseq
      %v183 = vshrl.u32 %v182, 7
      %v184 = vsub.s32 7, %v183
      %v185 = vrot.slane %v45, %v184
      %187 = vbcast.lane.b32.xlu0 %v185, 256
      %v188 = vpop.permute.xlu0 %187
      %s190 = sor.u32 256, 8
      %191 = vbcast.lane.b32.xlu0 %v185, %s190
      %v192 = vpop.permute.xlu0 %191
      %s194 = sor.u32 256, 16
      %195 = vbcast.lane.b32.xlu0 %v185, %s194
      %v196 = vpop.permute.xlu0 %195
      %s198 = sor.u32 256, 24
      %199 = vbcast.lane.b32.xlu0 %v185, %s198
      %v200 = vpop.permute.xlu0 %199
      %v201 = vlaneseq
      %v202 = vshrl.u32 %v201, 7
      %v203 = vsub.s32 0, %v202
      %v204 = vrot.slane %v46, %v203
      %206 = vbcast.lane.b32.xlu0 %v204, 256
      %v207 = vpop.permute.xlu0 %206
      %s209 = sor.u32 256, 8
      %210 = vbcast.lane.b32.xlu0 %v204, %s209
      %v211 = vpop.permute.xlu0 %210
      %s213 = sor.u32 256, 16
      %214 = vbcast.lane.b32.xlu0 %v204, %s213
      %v215 = vpop.permute.xlu0 %214
      %s217 = sor.u32 256, 24
      %218 = vbcast.lane.b32.xlu0 %v204, %s217
      %v219 = vpop.permute.xlu0 %218
      %v220 = vlaneseq
      %v221 = vshrl.u32 %v220, 7
      %v222 = vsub.s32 1, %v221
      %v223 = vrot.slane %v46, %v222
      %225 = vbcast.lane.b32.xlu0 %v223, 256
      %v226 = vpop.permute.xlu0 %225
      %s228 = sor.u32 256, 8
      %229 = vbcast.lane.b32.xlu0 %v223, %s228
      %v230 = vpop.permute.xlu0 %229
      %s232 = sor.u32 256, 16
      %233 = vbcast.lane.b32.xlu0 %v223, %s232
      %v234 = vpop.permute.xlu0 %233
      %s236 = sor.u32 256, 24
      %237 = vbcast.lane.b32.xlu0 %v223, %s236
      %v238 = vpop.permute.xlu0 %237
      %v239 = vlaneseq
      %v240 = vshrl.u32 %v239, 7
      %v241 = vsub.s32 2, %v240
      %v242 = vrot.slane %v46, %v241
      %244 = vbcast.lane.b32.xlu0 %v242, 256
      %v245 = vpop.permute.xlu0 %244
      %s247 = sor.u32 256, 8
      %248 = vbcast.lane.b32.xlu0 %v242, %s247
      %v249 = vpop.permute.xlu0 %248
      %s251 = sor.u32 256, 16
      %252 = vbcast.lane.b32.xlu0 %v242, %s251
      %v253 = vpop.permute.xlu0 %252
      %s255 = sor.u32 256, 24
      %256 = vbcast.lane.b32.xlu0 %v242, %s255
      %v257 = vpop.permute.xlu0 %256
      %v258 = vlaneseq
      %v259 = vshrl.u32 %v258, 7
      %v260 = vsub.s32 3, %v259
      %v261 = vrot.slane %v46, %v260
      %263 = vbcast.lane.b32.xlu0 %v261, 256
      %v264 = vpop.permute.xlu0 %263
      %s266 = sor.u32 256, 8
      %267 = vbcast.lane.b32.xlu0 %v261, %s266
      %v268 = vpop.permute.xlu0 %267
      %s270 = sor.u32 256, 16
      %271 = vbcast.lane.b32.xlu0 %v261, %s270
      %v272 = vpop.permute.xlu0 %271
      %s274 = sor.u32 256, 24
      %275 = vbcast.lane.b32.xlu0 %v261, %s274
      %v276 = vpop.permute.xlu0 %275
      %v277 = vlaneseq
      %v278 = vshrl.u32 %v277, 7
      %v279 = vsub.s32 4, %v278
      %v280 = vrot.slane %v46, %v279
      %282 = vbcast.lane.b32.xlu0 %v280, 256
      %v283 = vpop.permute.xlu0 %282
      %s285 = sor.u32 256, 8
      %286 = vbcast.lane.b32.xlu0 %v280, %s285
      %v287 = vpop.permute.xlu0 %286
      %s289 = sor.u32 256, 16
      %290 = vbcast.lane.b32.xlu0 %v280, %s289
      %v291 = vpop.permute.xlu0 %290
      %s293 = sor.u32 256, 24
      %294 = vbcast.lane.b32.xlu0 %v280, %s293
      %v295 = vpop.permute.xlu0 %294
      %v296 = vlaneseq
      %v297 = vshrl.u32 %v296, 7
      %v298 = vsub.s32 5, %v297
      %v299 = vrot.slane %v46, %v298
      %301 = vbcast.lane.b32.xlu0 %v299, 256
      %v302 = vpop.permute.xlu0 %301
      %s304 = sor.u32 256, 8
      %305 = vbcast.lane.b32.xlu0 %v299, %s304
      %v306 = vpop.permute.xlu0 %305
      %s308 = sor.u32 256, 16
      %309 = vbcast.lane.b32.xlu0 %v299, %s308
      %v310 = vpop.permute.xlu0 %309
      %s312 = sor.u32 256, 24
      %313 = vbcast.lane.b32.xlu0 %v299, %s312
      %v314 = vpop.permute.xlu0 %313
      %v315 = vlaneseq
      %v316 = vshrl.u32 %v315, 7
      %v317 = vsub.s32 6, %v316
      %v318 = vrot.slane %v46, %v317
      %320 = vbcast.lane.b32.xlu0 %v318, 256
      %v321 = vpop.permute.xlu0 %320
      %s323 = sor.u32 256, 8
      %324 = vbcast.lane.b32.xlu0 %v318, %s323
      %v325 = vpop.permute.xlu0 %324
      %s327 = sor.u32 256, 16
      %328 = vbcast.lane.b32.xlu0 %v318, %s327
      %v329 = vpop.permute.xlu0 %328
      %s331 = sor.u32 256, 24
      %332 = vbcast.lane.b32.xlu0 %v318, %s331
      %v333 = vpop.permute.xlu0 %332
      %v334 = vlaneseq
      %v335 = vshrl.u32 %v334, 7
      %v336 = vsub.s32 7, %v335
      %v337 = vrot.slane %v46, %v336
      %339 = vbcast.lane.b32.xlu0 %v337, 256
      %v340 = vpop.permute.xlu0 %339
      %s342 = sor.u32 256, 8
      %343 = vbcast.lane.b32.xlu0 %v337, %s342
      %v344 = vpop.permute.xlu0 %343
      %s346 = sor.u32 256, 16
      %347 = vbcast.lane.b32.xlu0 %v337, %s346
      %v348 = vpop.permute.xlu0 %347
      %s350 = sor.u32 256, 24
      %351 = vbcast.lane.b32.xlu0 %v337, %s350
      %v352 = vpop.permute.xlu0 %351
      %v353 = vcombine.low %v55, %v93
      %v354 = vcombine.high %v55, %v93
      %v356 = vunpack.c.l.s4 1983009808
      %v357 = vunpack.c.0.s8 %v356
      %v358 = vlaneseq
      %v359 = vshrl.u32 %v358, 7
      %v360 = vsub.s32 %v357, %v359
      %v361 = vrot.slane %v353, %v360
      %v363 = vunpack.c.l.s4 1983009808
      %v364 = vunpack.c.0.s8 %v363
      %v365 = vlaneseq
      %v366 = vshrl.u32 %v365, 7
      %v367 = vsub.s32 %v364, %v366
      %v368 = vrot.slane %v354, %v367
      %v369 = vcombine.low %v74, %v112
      %v370 = vcombine.high %v74, %v112
      %v372 = vunpack.c.l.s4 1983009808
      %v373 = vunpack.c.0.s8 %v372
      %v374 = vlaneseq
      %v375 = vshrl.u32 %v374, 7
      %v376 = vsub.s32 %v373, %v375
      %v377 = vrot.slane %v369, %v376
      %v379 = vunpack.c.l.s4 1983009808
      %v380 = vunpack.c.0.s8 %v379
      %v381 = vlaneseq
      %v382 = vshrl.u32 %v381, 7
      %v383 = vsub.s32 %v380, %v382
      %v384 = vrot.slane %v370, %v383
      %v385 = vcombine.low %v131, %v169
      %v386 = vcombine.high %v131, %v169
      %v388 = vunpack.c.l.s4 1983009808
      %v389 = vunpack.c.0.s8 %v388
      %v390 = vlaneseq
      %v391 = vshrl.u32 %v390, 7
      %v392 = vsub.s32 %v389, %v391
      %v393 = vrot.slane %v385, %v392
      %v395 = vunpack.c.l.s4 1983009808
      %v396 = vunpack.c.0.s8 %v395
      %v397 = vlaneseq
      %v398 = vshrl.u32 %v397, 7
      %v399 = vsub.s32 %v396, %v398
      %v400 = vrot.slane %v386, %v399
      %v401 = vcombine.low %v150, %v188
      %v402 = vcombine.high %v150, %v188
      %v404 = vunpack.c.l.s4 1983009808
      %v405 = vunpack.c.0.s8 %v404
      %v406 = vlaneseq
      %v407 = vshrl.u32 %v406, 7
      %v408 = vsub.s32 %v405, %v407
      %v409 = vrot.slane %v401, %v408
      %v411 = vunpack.c.l.s4 1983009808
      %v412 = vunpack.c.0.s8 %v411
      %v413 = vlaneseq
      %v414 = vshrl.u32 %v413, 7
      %v415 = vsub.s32 %v412, %v414
      %v416 = vrot.slane %v402, %v415
      %v417 = vcombine.low %v361, %v377
      %v418 = vcombine.high %v361, %v377
      %v420 = vunpack.c.l.s4 1934713408
      %v421 = vunpack.c.0.s8 %v420
      %v422 = vlaneseq
      %v423 = vshrl.u32 %v422, 7
      %v424 = vsub.s32 %v421, %v423
      %v425 = vrot.slane %v417, %v424
      %v427 = vunpack.c.l.s4 1934713408
      %v428 = vunpack.c.0.s8 %v427
      %v429 = vlaneseq
      %v430 = vshrl.u32 %v429, 7
      %v431 = vsub.s32 %v428, %v430
      %v432 = vrot.slane %v418, %v431
      %v433 = vcombine.low %v368, %v384
      %v434 = vcombine.high %v368, %v384
      %v436 = vunpack.c.l.s4 1934713408
      %v437 = vunpack.c.0.s8 %v436
      %v438 = vlaneseq
      %v439 = vshrl.u32 %v438, 7
      %v440 = vsub.s32 %v437, %v439
      %v441 = vrot.slane %v433, %v440
      %v443 = vunpack.c.l.s4 1934713408
      %v444 = vunpack.c.0.s8 %v443
      %v445 = vlaneseq
      %v446 = vshrl.u32 %v445, 7
      %v447 = vsub.s32 %v444, %v446
      %v448 = vrot.slane %v434, %v447
      %v449 = vcombine.low %v393, %v409
      %v450 = vcombine.high %v393, %v409
      %v452 = vunpack.c.l.s4 1934713408
      %v453 = vunpack.c.0.s8 %v452
      %v454 = vlaneseq
      %v455 = vshrl.u32 %v454, 7
      %v456 = vsub.s32 %v453, %v455
      %v457 = vrot.slane %v449, %v456
      %v459 = vunpack.c.l.s4 1934713408
      %v460 = vunpack.c.0.s8 %v459
      %v461 = vlaneseq
      %v462 = vshrl.u32 %v461, 7
      %v463 = vsub.s32 %v460, %v462
      %v464 = vrot.slane %v450, %v463
      %v465 = vcombine.low %v400, %v416
      %v466 = vcombine.high %v400, %v416
      %v468 = vunpack.c.l.s4 1934713408
      %v469 = vunpack.c.0.s8 %v468
      %v470 = vlaneseq
      %v471 = vshrl.u32 %v470, 7
      %v472 = vsub.s32 %v469, %v471
      %v473 = vrot.slane %v465, %v472
      %v475 = vunpack.c.l.s4 1934713408
      %v476 = vunpack.c.0.s8 %v475
      %v477 = vlaneseq
      %v478 = vshrl.u32 %v477, 7
      %v479 = vsub.s32 %v476, %v478
      %v480 = vrot.slane %v466, %v479
      %v481 = vcombine.low %v425, %v457
      %v482 = vcombine.high %v425, %v457
      %v483 = vcombine.low %v432, %v464
      %v484 = vcombine.high %v432, %v464
      %v485 = vcombine.low %v441, %v473
      %v486 = vcombine.high %v441, %v473
      %v487 = vcombine.low %v448, %v480
      %v488 = vcombine.high %v448, %v480
      %v489 = vcombine.low %v207, %v245
      %v490 = vcombine.high %v207, %v245
      %v492 = vunpack.c.l.s4 1983009808
      %v493 = vunpack.c.0.s8 %v492
      %v494 = vlaneseq
      %v495 = vshrl.u32 %v494, 7
      %v496 = vsub.s32 %v493, %v495
      %v497 = vrot.slane %v489, %v496
      %v499 = vunpack.c.l.s4 1983009808
      %v500 = vunpack.c.0.s8 %v499
      %v501 = vlaneseq
      %v502 = vshrl.u32 %v501, 7
      %v503 = vsub.s32 %v500, %v502
      %v504 = vrot.slane %v490, %v503
      %v505 = vcombine.low %v226, %v264
      %v506 = vcombine.high %v226, %v264
      %v508 = vunpack.c.l.s4 1983009808
      %v509 = vunpack.c.0.s8 %v508
      %v510 = vlaneseq
      %v511 = vshrl.u32 %v510, 7
      %v512 = vsub.s32 %v509, %v511
      %v513 = vrot.slane %v505, %v512
      %v515 = vunpack.c.l.s4 1983009808
      %v516 = vunpack.c.0.s8 %v515
      %v517 = vlaneseq
      %v518 = vshrl.u32 %v517, 7
      %v519 = vsub.s32 %v516, %v518
      %v520 = vrot.slane %v506, %v519
      %v521 = vcombine.low %v283, %v321
      %v522 = vcombine.high %v283, %v321
      %v524 = vunpack.c.l.s4 1983009808
      %v525 = vunpack.c.0.s8 %v524
      %v526 = vlaneseq
      %v527 = vshrl.u32 %v526, 7
      %v528 = vsub.s32 %v525, %v527
      %v529 = vrot.slane %v521, %v528
      %v531 = vunpack.c.l.s4 1983009808
      %v532 = vunpack.c.0.s8 %v531
      %v533 = vlaneseq
      %v534 = vshrl.u32 %v533, 7
      %v535 = vsub.s32 %v532, %v534
      %v536 = vrot.slane %v522, %v535
      %v537 = vcombine.low %v302, %v340
      %v538 = vcombine.high %v302, %v340
      %v540 = vunpack.c.l.s4 1983009808
      %v541 = vunpack.c.0.s8 %v540
      %v542 = vlaneseq
      %v543 = vshrl.u32 %v542, 7
      %v544 = vsub.s32 %v541, %v543
      %v545 = vrot.slane %v537, %v544
      %v547 = vunpack.c.l.s4 1983009808
      %v548 = vunpack.c.0.s8 %v547
      %v549 = vlaneseq
      %v550 = vshrl.u32 %v549, 7
      %v551 = vsub.s32 %v548, %v550
      %v552 = vrot.slane %v538, %v551
      %v553 = vcombine.low %v497, %v513
      %v554 = vcombine.high %v497, %v513
      %v556 = vunpack.c.l.s4 1934713408
      %v557 = vunpack.c.0.s8 %v556
      %v558 = vlaneseq
      %v559 = vshrl.u32 %v558, 7
      %v560 = vsub.s32 %v557, %v559
      %v561 = vrot.slane %v553, %v560
      %v563 = vunpack.c.l.s4 1934713408
      %v564 = vunpack.c.0.s8 %v563
      %v565 = vlaneseq
      %v566 = vshrl.u32 %v565, 7
      %v567 = vsub.s32 %v564, %v566
      %v568 = vrot.slane %v554, %v567
      %v569 = vcombine.low %v504, %v520
      %v570 = vcombine.high %v504, %v520
      %v572 = vunpack.c.l.s4 1934713408
      %v573 = vunpack.c.0.s8 %v572
      %v574 = vlaneseq
      %v575 = vshrl.u32 %v574, 7
      %v576 = vsub.s32 %v573, %v575
      %v577 = vrot.slane %v569, %v576
      %v579 = vunpack.c.l.s4 1934713408
      %v580 = vunpack.c.0.s8 %v579
      %v581 = vlaneseq
      %v582 = vshrl.u32 %v581, 7
      %v583 = vsub.s32 %v580, %v582
      %v584 = vrot.slane %v570, %v583
      %v585 = vcombine.low %v529, %v545
      %v586 = vcombine.high %v529, %v545
      %v588 = vunpack.c.l.s4 1934713408
      %v589 = vunpack.c.0.s8 %v588
      %v590 = vlaneseq
      %v591 = vshrl.u32 %v590, 7
      %v592 = vsub.s32 %v589, %v591
      %v593 = vrot.slane %v585, %v592
      %v595 = vunpack.c.l.s4 1934713408
      %v596 = vunpack.c.0.s8 %v595
      %v597 = vlaneseq
      %v598 = vshrl.u32 %v597, 7
      %v599 = vsub.s32 %v596, %v598
      %v600 = vrot.slane %v586, %v599
      %v601 = vcombine.low %v536, %v552
      %v602 = vcombine.high %v536, %v552
      %v604 = vunpack.c.l.s4 1934713408
      %v605 = vunpack.c.0.s8 %v604
      %v606 = vlaneseq
      %v607 = vshrl.u32 %v606, 7
      %v608 = vsub.s32 %v605, %v607
      %v609 = vrot.slane %v601, %v608
      %v611 = vunpack.c.l.s4 1934713408
      %v612 = vunpack.c.0.s8 %v611
      %v613 = vlaneseq
      %v614 = vshrl.u32 %v613, 7
      %v615 = vsub.s32 %v612, %v614
      %v616 = vrot.slane %v602, %v615
      %v617 = vcombine.low %v561, %v593
      %v618 = vcombine.high %v561, %v593
      %v619 = vcombine.low %v568, %v600
      %v620 = vcombine.high %v568, %v600
      %v621 = vcombine.low %v577, %v609
      %v622 = vcombine.high %v577, %v609
      %v623 = vcombine.low %v584, %v616
      %v624 = vcombine.high %v584, %v616
      %v625 = vcombine.low %v59, %v97
      %v626 = vcombine.high %v59, %v97
      %v628 = vunpack.c.l.s4 1983009808
      %v629 = vunpack.c.0.s8 %v628
      %v630 = vlaneseq
      %v631 = vshrl.u32 %v630, 7
      %v632 = vsub.s32 %v629, %v631
      %v633 = vrot.slane %v625, %v632
      %v635 = vunpack.c.l.s4 1983009808
      %v636 = vunpack.c.0.s8 %v635
      %v637 = vlaneseq
      %v638 = vshrl.u32 %v637, 7
      %v639 = vsub.s32 %v636, %v638
      %v640 = vrot.slane %v626, %v639
      %v641 = vcombine.low %v78, %v116
      %v642 = vcombine.high %v78, %v116
      %v644 = vunpack.c.l.s4 1983009808
      %v645 = vunpack.c.0.s8 %v644
      %v646 = vlaneseq
      %v647 = vshrl.u32 %v646, 7
      %v648 = vsub.s32 %v645, %v647
      %v649 = vrot.slane %v641, %v648
      %v651 = vunpack.c.l.s4 1983009808
      %v652 = vunpack.c.0.s8 %v651
      %v653 = vlaneseq
      %v654 = vshrl.u32 %v653, 7
      %v655 = vsub.s32 %v652, %v654
      %v656 = vrot.slane %v642, %v655
      %v657 = vcombine.low %v135, %v173
      %v658 = vcombine.high %v135, %v173
      %v660 = vunpack.c.l.s4 1983009808
      %v661 = vunpack.c.0.s8 %v660
      %v662 = vlaneseq
      %v663 = vshrl.u32 %v662, 7
      %v664 = vsub.s32 %v661, %v663
      %v665 = vrot.slane %v657, %v664
      %v667 = vunpack.c.l.s4 1983009808
      %v668 = vunpack.c.0.s8 %v667
      %v669 = vlaneseq
      %v670 = vshrl.u32 %v669, 7
      %v671 = vsub.s32 %v668, %v670
      %v672 = vrot.slane %v658, %v671
      %v673 = vcombine.low %v154, %v192
      %v674 = vcombine.high %v154, %v192
      %v676 = vunpack.c.l.s4 1983009808
      %v677 = vunpack.c.0.s8 %v676
      %v678 = vlaneseq
      %v679 = vshrl.u32 %v678, 7
      %v680 = vsub.s32 %v677, %v679
      %v681 = vrot.slane %v673, %v680
      %v683 = vunpack.c.l.s4 1983009808
      %v684 = vunpack.c.0.s8 %v683
      %v685 = vlaneseq
      %v686 = vshrl.u32 %v685, 7
      %v687 = vsub.s32 %v684, %v686
      %v688 = vrot.slane %v674, %v687
      %v689 = vcombine.low %v633, %v649
      %v690 = vcombine.high %v633, %v649
      %v692 = vunpack.c.l.s4 1934713408
      %v693 = vunpack.c.0.s8 %v692
      %v694 = vlaneseq
      %v695 = vshrl.u32 %v694, 7
      %v696 = vsub.s32 %v693, %v695
      %v697 = vrot.slane %v689, %v696
      %v699 = vunpack.c.l.s4 1934713408
      %v700 = vunpack.c.0.s8 %v699
      %v701 = vlaneseq
      %v702 = vshrl.u32 %v701, 7
      %v703 = vsub.s32 %v700, %v702
      %v704 = vrot.slane %v690, %v703
      %v705 = vcombine.low %v640, %v656
      %v706 = vcombine.high %v640, %v656
      %v708 = vunpack.c.l.s4 1934713408
      %v709 = vunpack.c.0.s8 %v708
      %v710 = vlaneseq
      %v711 = vshrl.u32 %v710, 7
      %v712 = vsub.s32 %v709, %v711
      %v713 = vrot.slane %v705, %v712
      %v715 = vunpack.c.l.s4 1934713408
      %v716 = vunpack.c.0.s8 %v715
      %v717 = vlaneseq
      %v718 = vshrl.u32 %v717, 7
      %v719 = vsub.s32 %v716, %v718
      %v720 = vrot.slane %v706, %v719
      %v721 = vcombine.low %v665, %v681
      %v722 = vcombine.high %v665, %v681
      %v724 = vunpack.c.l.s4 1934713408
      %v725 = vunpack.c.0.s8 %v724
      %v726 = vlaneseq
      %v727 = vshrl.u32 %v726, 7
      %v728 = vsub.s32 %v725, %v727
      %v729 = vrot.slane %v721, %v728
      %v731 = vunpack.c.l.s4 1934713408
      %v732 = vunpack.c.0.s8 %v731
      %v733 = vlaneseq
      %v734 = vshrl.u32 %v733, 7
      %v735 = vsub.s32 %v732, %v734
      %v736 = vrot.slane %v722, %v735
      %v737 = vcombine.low %v672, %v688
      %v738 = vcombine.high %v672, %v688
      %v740 = vunpack.c.l.s4 1934713408
      %v741 = vunpack.c.0.s8 %v740
      %v742 = vlaneseq
      %v743 = vshrl.u32 %v742, 7
      %v744 = vsub.s32 %v741, %v743
      %v745 = vrot.slane %v737, %v744
      %v747 = vunpack.c.l.s4 1934713408
      %v748 = vunpack.c.0.s8 %v747
      %v749 = vlaneseq
      %v750 = vshrl.u32 %v749, 7
      %v751 = vsub.s32 %v748, %v750
      %v752 = vrot.slane %v738, %v751
      %v753 = vcombine.low %v697, %v729
      %v754 = vcombine.high %v697, %v729
      %v755 = vcombine.low %v704, %v736
      %v756 = vcombine.high %v704, %v736
      %v757 = vcombine.low %v713, %v745
      %v758 = vcombine.high %v713, %v745
      %v759 = vcombine.low %v720, %v752
      %v760 = vcombine.high %v720, %v752
      %v761 = vcombine.low %v211, %v249
      %v762 = vcombine.high %v211, %v249
      %v764 = vunpack.c.l.s4 1983009808
      %v765 = vunpack.c.0.s8 %v764
      %v766 = vlaneseq
      %v767 = vshrl.u32 %v766, 7
      %v768 = vsub.s32 %v765, %v767
      %v769 = vrot.slane %v761, %v768
      %v771 = vunpack.c.l.s4 1983009808
      %v772 = vunpack.c.0.s8 %v771
      %v773 = vlaneseq
      %v774 = vshrl.u32 %v773, 7
      %v775 = vsub.s32 %v772, %v774
      %v776 = vrot.slane %v762, %v775
      %v777 = vcombine.low %v230, %v268
      %v778 = vcombine.high %v230, %v268
      %v780 = vunpack.c.l.s4 1983009808
      %v781 = vunpack.c.0.s8 %v780
      %v782 = vlaneseq
      %v783 = vshrl.u32 %v782, 7
      %v784 = vsub.s32 %v781, %v783
      %v785 = vrot.slane %v777, %v784
      %v787 = vunpack.c.l.s4 1983009808
      %v788 = vunpack.c.0.s8 %v787
      %v789 = vlaneseq
      %v790 = vshrl.u32 %v789, 7
      %v791 = vsub.s32 %v788, %v790
      %v792 = vrot.slane %v778, %v791
      %v793 = vcombine.low %v287, %v325
      %v794 = vcombine.high %v287, %v325
      %v796 = vunpack.c.l.s4 1983009808
      %v797 = vunpack.c.0.s8 %v796
      %v798 = vlaneseq
      %v799 = vshrl.u32 %v798, 7
      %v800 = vsub.s32 %v797, %v799
      %v801 = vrot.slane %v793, %v800
      %v803 = vunpack.c.l.s4 1983009808
      %v804 = vunpack.c.0.s8 %v803
      %v805 = vlaneseq
      %v806 = vshrl.u32 %v805, 7
      %v807 = vsub.s32 %v804, %v806
      %v808 = vrot.slane %v794, %v807
      %v809 = vcombine.low %v306, %v344
      %v810 = vcombine.high %v306, %v344
      %v812 = vunpack.c.l.s4 1983009808
      %v813 = vunpack.c.0.s8 %v812
      %v814 = vlaneseq
      %v815 = vshrl.u32 %v814, 7
      %v816 = vsub.s32 %v813, %v815
      %v817 = vrot.slane %v809, %v816
      %v819 = vunpack.c.l.s4 1983009808
      %v820 = vunpack.c.0.s8 %v819
      %v821 = vlaneseq
      %v822 = vshrl.u32 %v821, 7
      %v823 = vsub.s32 %v820, %v822
      %v824 = vrot.slane %v810, %v823
      %v825 = vcombine.low %v769, %v785
      %v826 = vcombine.high %v769, %v785
      %v828 = vunpack.c.l.s4 1934713408
      %v829 = vunpack.c.0.s8 %v828
      %v830 = vlaneseq
      %v831 = vshrl.u32 %v830, 7
      %v832 = vsub.s32 %v829, %v831
      %v833 = vrot.slane %v825, %v832
      %v835 = vunpack.c.l.s4 1934713408
      %v836 = vunpack.c.0.s8 %v835
      %v837 = vlaneseq
      %v838 = vshrl.u32 %v837, 7
      %v839 = vsub.s32 %v836, %v838
      %v840 = vrot.slane %v826, %v839
      %v841 = vcombine.low %v776, %v792
      %v842 = vcombine.high %v776, %v792
      %v844 = vunpack.c.l.s4 1934713408
      %v845 = vunpack.c.0.s8 %v844
      %v846 = vlaneseq
      %v847 = vshrl.u32 %v846, 7
      %v848 = vsub.s32 %v845, %v847
      %v849 = vrot.slane %v841, %v848
      %v851 = vunpack.c.l.s4 1934713408
      %v852 = vunpack.c.0.s8 %v851
      %v853 = vlaneseq
      %v854 = vshrl.u32 %v853, 7
      %v855 = vsub.s32 %v852, %v854
      %v856 = vrot.slane %v842, %v855
      %v857 = vcombine.low %v801, %v817
      %v858 = vcombine.high %v801, %v817
      %v860 = vunpack.c.l.s4 1934713408
      %v861 = vunpack.c.0.s8 %v860
      %v862 = vlaneseq
      %v863 = vshrl.u32 %v862, 7
      %v864 = vsub.s32 %v861, %v863
      %v865 = vrot.slane %v857, %v864
      %v867 = vunpack.c.l.s4 1934713408
      %v868 = vunpack.c.0.s8 %v867
      %v869 = vlaneseq
      %v870 = vshrl.u32 %v869, 7
      %v871 = vsub.s32 %v868, %v870
      %v872 = vrot.slane %v858, %v871
      %v873 = vcombine.low %v808, %v824
      %v874 = vcombine.high %v808, %v824
      %v876 = vunpack.c.l.s4 1934713408
      %v877 = vunpack.c.0.s8 %v876
      %v878 = vlaneseq
      %v879 = vshrl.u32 %v878, 7
      %v880 = vsub.s32 %v877, %v879
      %v881 = vrot.slane %v873, %v880
      %v883 = vunpack.c.l.s4 1934713408
      %v884 = vunpack.c.0.s8 %v883
      %v885 = vlaneseq
      %v886 = vshrl.u32 %v885, 7
      %v887 = vsub.s32 %v884, %v886
      %v888 = vrot.slane %v874, %v887
      %v889 = vcombine.low %v833, %v865
      %v890 = vcombine.high %v833, %v865
      %v891 = vcombine.low %v840, %v872
      %v892 = vcombine.high %v840, %v872
      %v893 = vcombine.low %v849, %v881
      %v894 = vcombine.high %v849, %v881
      %v895 = vcombine.low %v856, %v888
      %v896 = vcombine.high %v856, %v888
      %v897 = vcombine.low %v63, %v101
      %v898 = vcombine.high %v63, %v101
      %v900 = vunpack.c.l.s4 1983009808
      %v901 = vunpack.c.0.s8 %v900
      %v902 = vlaneseq
      %v903 = vshrl.u32 %v902, 7
      %v904 = vsub.s32 %v901, %v903
      %v905 = vrot.slane %v897, %v904
      %v907 = vunpack.c.l.s4 1983009808
      %v908 = vunpack.c.0.s8 %v907
      %v909 = vlaneseq
      %v910 = vshrl.u32 %v909, 7
      %v911 = vsub.s32 %v908, %v910
      %v912 = vrot.slane %v898, %v911
      %v913 = vcombine.low %v82, %v120
      %v914 = vcombine.high %v82, %v120
      %v916 = vunpack.c.l.s4 1983009808
      %v917 = vunpack.c.0.s8 %v916
      %v918 = vlaneseq
      %v919 = vshrl.u32 %v918, 7
      %v920 = vsub.s32 %v917, %v919
      %v921 = vrot.slane %v913, %v920
      %v923 = vunpack.c.l.s4 1983009808
      %v924 = vunpack.c.0.s8 %v923
      %v925 = vlaneseq
      %v926 = vshrl.u32 %v925, 7
      %v927 = vsub.s32 %v924, %v926
      %v928 = vrot.slane %v914, %v927
      %v929 = vcombine.low %v139, %v177
      %v930 = vcombine.high %v139, %v177
      %v932 = vunpack.c.l.s4 1983009808
      %v933 = vunpack.c.0.s8 %v932
      %v934 = vlaneseq
      %v935 = vshrl.u32 %v934, 7
      %v936 = vsub.s32 %v933, %v935
      %v937 = vrot.slane %v929, %v936
      %v939 = vunpack.c.l.s4 1983009808
      %v940 = vunpack.c.0.s8 %v939
      %v941 = vlaneseq
      %v942 = vshrl.u32 %v941, 7
      %v943 = vsub.s32 %v940, %v942
      %v944 = vrot.slane %v930, %v943
      %v945 = vcombine.low %v158, %v196
      %v946 = vcombine.high %v158, %v196
      %v948 = vunpack.c.l.s4 1983009808
      %v949 = vunpack.c.0.s8 %v948
      %v950 = vlaneseq
      %v951 = vshrl.u32 %v950, 7
      %v952 = vsub.s32 %v949, %v951
      %v953 = vrot.slane %v945, %v952
      %v955 = vunpack.c.l.s4 1983009808
      %v956 = vunpack.c.0.s8 %v955
      %v957 = vlaneseq
      %v958 = vshrl.u32 %v957, 7
      %v959 = vsub.s32 %v956, %v958
      %v960 = vrot.slane %v946, %v959
      %v961 = vcombine.low %v905, %v921
      %v962 = vcombine.high %v905, %v921
      %v964 = vunpack.c.l.s4 1934713408
      %v965 = vunpack.c.0.s8 %v964
      %v966 = vlaneseq
      %v967 = vshrl.u32 %v966, 7
      %v968 = vsub.s32 %v965, %v967
      %v969 = vrot.slane %v961, %v968
      %v971 = vunpack.c.l.s4 1934713408
      %v972 = vunpack.c.0.s8 %v971
      %v973 = vlaneseq
      %v974 = vshrl.u32 %v973, 7
      %v975 = vsub.s32 %v972, %v974
      %v976 = vrot.slane %v962, %v975
      %v977 = vcombine.low %v912, %v928
      %v978 = vcombine.high %v912, %v928
      %v980 = vunpack.c.l.s4 1934713408
      %v981 = vunpack.c.0.s8 %v980
      %v982 = vlaneseq
      %v983 = vshrl.u32 %v982, 7
      %v984 = vsub.s32 %v981, %v983
      %v985 = vrot.slane %v977, %v984
      %v987 = vunpack.c.l.s4 1934713408
      %v988 = vunpack.c.0.s8 %v987
      %v989 = vlaneseq
      %v990 = vshrl.u32 %v989, 7
      %v991 = vsub.s32 %v988, %v990
      %v992 = vrot.slane %v978, %v991
      %v993 = vcombine.low %v937, %v953
      %v994 = vcombine.high %v937, %v953
      %v996 = vunpack.c.l.s4 1934713408
      %v997 = vunpack.c.0.s8 %v996
      %v998 = vlaneseq
      %v999 = vshrl.u32 %v998, 7
      %v1000 = vsub.s32 %v997, %v999
      %v1001 = vrot.slane %v993, %v1000
      %v1003 = vunpack.c.l.s4 1934713408
      %v1004 = vunpack.c.0.s8 %v1003
      %v1005 = vlaneseq
      %v1006 = vshrl.u32 %v1005, 7
      %v1007 = vsub.s32 %v1004, %v1006
      %v1008 = vrot.slane %v994, %v1007
      %v1009 = vcombine.low %v944, %v960
      %v1010 = vcombine.high %v944, %v960
      %v1012 = vunpack.c.l.s4 1934713408
      %v1013 = vunpack.c.0.s8 %v1012
      %v1014 = vlaneseq
      %v1015 = vshrl.u32 %v1014, 7
      %v1016 = vsub.s32 %v1013, %v1015
      %v1017 = vrot.slane %v1009, %v1016
      %v1019 = vunpack.c.l.s4 1934713408
      %v1020 = vunpack.c.0.s8 %v1019
      %v1021 = vlaneseq
      %v1022 = vshrl.u32 %v1021, 7
      %v1023 = vsub.s32 %v1020, %v1022
      %v1024 = vrot.slane %v1010, %v1023
      %v1025 = vcombine.low %v969, %v1001
      %v1026 = vcombine.high %v969, %v1001
      %v1027 = vcombine.low %v976, %v1008
      %v1028 = vcombine.high %v976, %v1008
      %v1029 = vcombine.low %v985, %v1017
      %v1030 = vcombine.high %v985, %v1017
      %v1031 = vcombine.low %v992, %v1024
      %v1032 = vcombine.high %v992, %v1024
      %v1033 = vcombine.low %v215, %v253
      %v1034 = vcombine.high %v215, %v253
      %v1036 = vunpack.c.l.s4 1983009808
      %v1037 = vunpack.c.0.s8 %v1036
      %v1038 = vlaneseq
      %v1039 = vshrl.u32 %v1038, 7
      %v1040 = vsub.s32 %v1037, %v1039
      %v1041 = vrot.slane %v1033, %v1040
      %v1043 = vunpack.c.l.s4 1983009808
      %v1044 = vunpack.c.0.s8 %v1043
      %v1045 = vlaneseq
      %v1046 = vshrl.u32 %v1045, 7
      %v1047 = vsub.s32 %v1044, %v1046
      %v1048 = vrot.slane %v1034, %v1047
      %v1049 = vcombine.low %v234, %v272
      %v1050 = vcombine.high %v234, %v272
      %v1052 = vunpack.c.l.s4 1983009808
      %v1053 = vunpack.c.0.s8 %v1052
      %v1054 = vlaneseq
      %v1055 = vshrl.u32 %v1054, 7
      %v1056 = vsub.s32 %v1053, %v1055
      %v1057 = vrot.slane %v1049, %v1056
      %v1059 = vunpack.c.l.s4 1983009808
      %v1060 = vunpack.c.0.s8 %v1059
      %v1061 = vlaneseq
      %v1062 = vshrl.u32 %v1061, 7
      %v1063 = vsub.s32 %v1060, %v1062
      %v1064 = vrot.slane %v1050, %v1063
      %v1065 = vcombine.low %v291, %v329
      %v1066 = vcombine.high %v291, %v329
      %v1068 = vunpack.c.l.s4 1983009808
      %v1069 = vunpack.c.0.s8 %v1068
      %v1070 = vlaneseq
      %v1071 = vshrl.u32 %v1070, 7
      %v1072 = vsub.s32 %v1069, %v1071
      %v1073 = vrot.slane %v1065, %v1072
      %v1075 = vunpack.c.l.s4 1983009808
      %v1076 = vunpack.c.0.s8 %v1075
      %v1077 = vlaneseq
      %v1078 = vshrl.u32 %v1077, 7
      %v1079 = vsub.s32 %v1076, %v1078
      %v1080 = vrot.slane %v1066, %v1079
      %v1081 = vcombine.low %v310, %v348
      %v1082 = vcombine.high %v310, %v348
      %v1084 = vunpack.c.l.s4 1983009808
      %v1085 = vunpack.c.0.s8 %v1084
      %v1086 = vlaneseq
      %v1087 = vshrl.u32 %v1086, 7
      %v1088 = vsub.s32 %v1085, %v1087
      %v1089 = vrot.slane %v1081, %v1088
      %v1091 = vunpack.c.l.s4 1983009808
      %v1092 = vunpack.c.0.s8 %v1091
      %v1093 = vlaneseq
      %v1094 = vshrl.u32 %v1093, 7
      %v1095 = vsub.s32 %v1092, %v1094
      %v1096 = vrot.slane %v1082, %v1095
      %v1097 = vcombine.low %v1041, %v1057
      %v1098 = vcombine.high %v1041, %v1057
      %v1100 = vunpack.c.l.s4 1934713408
      %v1101 = vunpack.c.0.s8 %v1100
      %v1102 = vlaneseq
      %v1103 = vshrl.u32 %v1102, 7
      %v1104 = vsub.s32 %v1101, %v1103
      %v1105 = vrot.slane %v1097, %v1104
      %v1107 = vunpack.c.l.s4 1934713408
      %v1108 = vunpack.c.0.s8 %v1107
      %v1109 = vlaneseq
      %v1110 = vshrl.u32 %v1109, 7
      %v1111 = vsub.s32 %v1108, %v1110
      %v1112 = vrot.slane %v1098, %v1111
      %v1113 = vcombine.low %v1048, %v1064
      %v1114 = vcombine.high %v1048, %v1064
      %v1116 = vunpack.c.l.s4 1934713408
      %v1117 = vunpack.c.0.s8 %v1116
      %v1118 = vlaneseq
      %v1119 = vshrl.u32 %v1118, 7
      %v1120 = vsub.s32 %v1117, %v1119
      %v1121 = vrot.slane %v1113, %v1120
      %v1123 = vunpack.c.l.s4 1934713408
      %v1124 = vunpack.c.0.s8 %v1123
      %v1125 = vlaneseq
      %v1126 = vshrl.u32 %v1125, 7
      %v1127 = vsub.s32 %v1124, %v1126
      %v1128 = vrot.slane %v1114, %v1127
      %v1129 = vcombine.low %v1073, %v1089
      %v1130 = vcombine.high %v1073, %v1089
      %v1132 = vunpack.c.l.s4 1934713408
      %v1133 = vunpack.c.0.s8 %v1132
      %v1134 = vlaneseq
      %v1135 = vshrl.u32 %v1134, 7
      %v1136 = vsub.s32 %v1133, %v1135
      %v1137 = vrot.slane %v1129, %v1136
      %v1139 = vunpack.c.l.s4 1934713408
      %v1140 = vunpack.c.0.s8 %v1139
      %v1141 = vlaneseq
      %v1142 = vshrl.u32 %v1141, 7
      %v1143 = vsub.s32 %v1140, %v1142
      %v1144 = vrot.slane %v1130, %v1143
      %v1145 = vcombine.low %v1080, %v1096
      %v1146 = vcombine.high %v1080, %v1096
      %v1148 = vunpack.c.l.s4 1934713408
      %v1149 = vunpack.c.0.s8 %v1148
      %v1150 = vlaneseq
      %v1151 = vshrl.u32 %v1150, 7
      %v1152 = vsub.s32 %v1149, %v1151
      %v1153 = vrot.slane %v1145, %v1152
      %v1155 = vunpack.c.l.s4 1934713408
      %v1156 = vunpack.c.0.s8 %v1155
      %v1157 = vlaneseq
      %v1158 = vshrl.u32 %v1157, 7
      %v1159 = vsub.s32 %v1156, %v1158
      %v1160 = vrot.slane %v1146, %v1159
      %v1161 = vcombine.low %v1105, %v1137
      %v1162 = vcombine.high %v1105, %v1137
      %v1163 = vcombine.low %v1112, %v1144
      %v1164 = vcombine.high %v1112, %v1144
      %v1165 = vcombine.low %v1121, %v1153
      %v1166 = vcombine.high %v1121, %v1153
      %v1167 = vcombine.low %v1128, %v1160
      %v1168 = vcombine.high %v1128, %v1160
      %v1169 = vcombine.low %v67, %v105
      %v1170 = vcombine.high %v67, %v105
      %v1172 = vunpack.c.l.s4 1983009808
      %v1173 = vunpack.c.0.s8 %v1172
      %v1174 = vlaneseq
      %v1175 = vshrl.u32 %v1174, 7
      %v1176 = vsub.s32 %v1173, %v1175
      %v1177 = vrot.slane %v1169, %v1176
      %v1179 = vunpack.c.l.s4 1983009808
      %v1180 = vunpack.c.0.s8 %v1179
      %v1181 = vlaneseq
      %v1182 = vshrl.u32 %v1181, 7
      %v1183 = vsub.s32 %v1180, %v1182
      %v1184 = vrot.slane %v1170, %v1183
      %v1185 = vcombine.low %v86, %v124
      %v1186 = vcombine.high %v86, %v124
      %v1188 = vunpack.c.l.s4 1983009808
      %v1189 = vunpack.c.0.s8 %v1188
      %v1190 = vlaneseq
      %v1191 = vshrl.u32 %v1190, 7
      %v1192 = vsub.s32 %v1189, %v1191
      %v1193 = vrot.slane %v1185, %v1192
      %v1195 = vunpack.c.l.s4 1983009808
      %v1196 = vunpack.c.0.s8 %v1195
      %v1197 = vlaneseq
      %v1198 = vshrl.u32 %v1197, 7
      %v1199 = vsub.s32 %v1196, %v1198
      %v1200 = vrot.slane %v1186, %v1199
      %v1201 = vcombine.low %v143, %v181
      %v1202 = vcombine.high %v143, %v181
      %v1204 = vunpack.c.l.s4 1983009808
      %v1205 = vunpack.c.0.s8 %v1204
      %v1206 = vlaneseq
      %v1207 = vshrl.u32 %v1206, 7
      %v1208 = vsub.s32 %v1205, %v1207
      %v1209 = vrot.slane %v1201, %v1208
      %v1211 = vunpack.c.l.s4 1983009808
      %v1212 = vunpack.c.0.s8 %v1211
      %v1213 = vlaneseq
      %v1214 = vshrl.u32 %v1213, 7
      %v1215 = vsub.s32 %v1212, %v1214
      %v1216 = vrot.slane %v1202, %v1215
      %v1217 = vcombine.low %v162, %v200
      %v1218 = vcombine.high %v162, %v200
      %v1220 = vunpack.c.l.s4 1983009808
      %v1221 = vunpack.c.0.s8 %v1220
      %v1222 = vlaneseq
      %v1223 = vshrl.u32 %v1222, 7
      %v1224 = vsub.s32 %v1221, %v1223
      %v1225 = vrot.slane %v1217, %v1224
      %v1227 = vunpack.c.l.s4 1983009808
      %v1228 = vunpack.c.0.s8 %v1227
      %v1229 = vlaneseq
      %v1230 = vshrl.u32 %v1229, 7
      %v1231 = vsub.s32 %v1228, %v1230
      %v1232 = vrot.slane %v1218, %v1231
      %v1233 = vcombine.low %v1177, %v1193
      %v1234 = vcombine.high %v1177, %v1193
      %v1236 = vunpack.c.l.s4 1934713408
      %v1237 = vunpack.c.0.s8 %v1236
      %v1238 = vlaneseq
      %v1239 = vshrl.u32 %v1238, 7
      %v1240 = vsub.s32 %v1237, %v1239
      %v1241 = vrot.slane %v1233, %v1240
      %v1243 = vunpack.c.l.s4 1934713408
      %v1244 = vunpack.c.0.s8 %v1243
      %v1245 = vlaneseq
      %v1246 = vshrl.u32 %v1245, 7
      %v1247 = vsub.s32 %v1244, %v1246
      %v1248 = vrot.slane %v1234, %v1247
      %v1249 = vcombine.low %v1184, %v1200
      %v1250 = vcombine.high %v1184, %v1200
      %v1252 = vunpack.c.l.s4 1934713408
      %v1253 = vunpack.c.0.s8 %v1252
      %v1254 = vlaneseq
      %v1255 = vshrl.u32 %v1254, 7
      %v1256 = vsub.s32 %v1253, %v1255
      %v1257 = vrot.slane %v1249, %v1256
      %v1259 = vunpack.c.l.s4 1934713408
      %v1260 = vunpack.c.0.s8 %v1259
      %v1261 = vlaneseq
      %v1262 = vshrl.u32 %v1261, 7
      %v1263 = vsub.s32 %v1260, %v1262
      %v1264 = vrot.slane %v1250, %v1263
      %v1265 = vcombine.low %v1209, %v1225
      %v1266 = vcombine.high %v1209, %v1225
      %v1268 = vunpack.c.l.s4 1934713408
      %v1269 = vunpack.c.0.s8 %v1268
      %v1270 = vlaneseq
      %v1271 = vshrl.u32 %v1270, 7
      %v1272 = vsub.s32 %v1269, %v1271
      %v1273 = vrot.slane %v1265, %v1272
      %v1275 = vunpack.c.l.s4 1934713408
      %v1276 = vunpack.c.0.s8 %v1275
      %v1277 = vlaneseq
      %v1278 = vshrl.u32 %v1277, 7
      %v1279 = vsub.s32 %v1276, %v1278
      %v1280 = vrot.slane %v1266, %v1279
      %v1281 = vcombine.low %v1216, %v1232
      %v1282 = vcombine.high %v1216, %v1232
      %v1284 = vunpack.c.l.s4 1934713408
      %v1285 = vunpack.c.0.s8 %v1284
      %v1286 = vlaneseq
      %v1287 = vshrl.u32 %v1286, 7
      %v1288 = vsub.s32 %v1285, %v1287
      %v1289 = vrot.slane %v1281, %v1288
      %v1291 = vunpack.c.l.s4 1934713408
      %v1292 = vunpack.c.0.s8 %v1291
      %v1293 = vlaneseq
      %v1294 = vshrl.u32 %v1293, 7
      %v1295 = vsub.s32 %v1292, %v1294
      %v1296 = vrot.slane %v1282, %v1295
      %v1297 = vcombine.low %v1241, %v1273
      %v1298 = vcombine.high %v1241, %v1273
      %v1299 = vcombine.low %v1248, %v1280
      %v1300 = vcombine.high %v1248, %v1280
      %v1301 = vcombine.low %v1257, %v1289
      %v1302 = vcombine.high %v1257, %v1289
      %v1303 = vcombine.low %v1264, %v1296
      %v1304 = vcombine.high %v1264, %v1296
      %v1305 = vcombine.low %v219, %v257
      %v1306 = vcombine.high %v219, %v257
      %v1308 = vunpack.c.l.s4 1983009808
      %v1309 = vunpack.c.0.s8 %v1308
      %v1310 = vlaneseq
      %v1311 = vshrl.u32 %v1310, 7
      %v1312 = vsub.s32 %v1309, %v1311
      %v1313 = vrot.slane %v1305, %v1312
      %v1315 = vunpack.c.l.s4 1983009808
      %v1316 = vunpack.c.0.s8 %v1315
      %v1317 = vlaneseq
      %v1318 = vshrl.u32 %v1317, 7
      %v1319 = vsub.s32 %v1316, %v1318
      %v1320 = vrot.slane %v1306, %v1319
      %v1321 = vcombine.low %v238, %v276
      %v1322 = vcombine.high %v238, %v276
      %v1324 = vunpack.c.l.s4 1983009808
      %v1325 = vunpack.c.0.s8 %v1324
      %v1326 = vlaneseq
      %v1327 = vshrl.u32 %v1326, 7
      %v1328 = vsub.s32 %v1325, %v1327
      %v1329 = vrot.slane %v1321, %v1328
      %v1331 = vunpack.c.l.s4 1983009808
      %v1332 = vunpack.c.0.s8 %v1331
      %v1333 = vlaneseq
      %v1334 = vshrl.u32 %v1333, 7
      %v1335 = vsub.s32 %v1332, %v1334
      %v1336 = vrot.slane %v1322, %v1335
      %v1337 = vcombine.low %v295, %v333
      %v1338 = vcombine.high %v295, %v333
      %v1340 = vunpack.c.l.s4 1983009808
      %v1341 = vunpack.c.0.s8 %v1340
      %v1342 = vlaneseq
      %v1343 = vshrl.u32 %v1342, 7
      %v1344 = vsub.s32 %v1341, %v1343
      %v1345 = vrot.slane %v1337, %v1344
      %v1347 = vunpack.c.l.s4 1983009808
      %v1348 = vunpack.c.0.s8 %v1347
      %v1349 = vlaneseq
      %v1350 = vshrl.u32 %v1349, 7
      %v1351 = vsub.s32 %v1348, %v1350
      %v1352 = vrot.slane %v1338, %v1351
      %v1353 = vcombine.low %v314, %v352
      %v1354 = vcombine.high %v314, %v352
      %v1356 = vunpack.c.l.s4 1983009808
      %v1357 = vunpack.c.0.s8 %v1356
      %v1358 = vlaneseq
      %v1359 = vshrl.u32 %v1358, 7
      %v1360 = vsub.s32 %v1357, %v1359
      %v1361 = vrot.slane %v1353, %v1360
      %v1363 = vunpack.c.l.s4 1983009808
      %v1364 = vunpack.c.0.s8 %v1363
      %v1365 = vlaneseq
      %v1366 = vshrl.u32 %v1365, 7
      %v1367 = vsub.s32 %v1364, %v1366
      %v1368 = vrot.slane %v1354, %v1367
      %v1369 = vcombine.low %v1313, %v1329
      %v1370 = vcombine.high %v1313, %v1329
      %v1372 = vunpack.c.l.s4 1934713408
      %v1373 = vunpack.c.0.s8 %v1372
      %v1374 = vlaneseq
      %v1375 = vshrl.u32 %v1374, 7
      %v1376 = vsub.s32 %v1373, %v1375
      %v1377 = vrot.slane %v1369, %v1376
      %v1379 = vunpack.c.l.s4 1934713408
      %v1380 = vunpack.c.0.s8 %v1379
      %v1381 = vlaneseq
      %v1382 = vshrl.u32 %v1381, 7
      %v1383 = vsub.s32 %v1380, %v1382
      %v1384 = vrot.slane %v1370, %v1383
      %v1385 = vcombine.low %v1320, %v1336
      %v1386 = vcombine.high %v1320, %v1336
      %v1388 = vunpack.c.l.s4 1934713408
      %v1389 = vunpack.c.0.s8 %v1388
      %v1390 = vlaneseq
      %v1391 = vshrl.u32 %v1390, 7
      %v1392 = vsub.s32 %v1389, %v1391
      %v1393 = vrot.slane %v1385, %v1392
      %v1395 = vunpack.c.l.s4 1934713408
      %v1396 = vunpack.c.0.s8 %v1395
      %v1397 = vlaneseq
      %v1398 = vshrl.u32 %v1397, 7
      %v1399 = vsub.s32 %v1396, %v1398
      %v1400 = vrot.slane %v1386, %v1399
      %v1401 = vcombine.low %v1345, %v1361
      %v1402 = vcombine.high %v1345, %v1361
      %v1404 = vunpack.c.l.s4 1934713408
      %v1405 = vunpack.c.0.s8 %v1404
      %v1406 = vlaneseq
      %v1407 = vshrl.u32 %v1406, 7
      %v1408 = vsub.s32 %v1405, %v1407
      %v1409 = vrot.slane %v1401, %v1408
      %v1411 = vunpack.c.l.s4 1934713408
      %v1412 = vunpack.c.0.s8 %v1411
      %v1413 = vlaneseq
      %v1414 = vshrl.u32 %v1413, 7
      %v1415 = vsub.s32 %v1412, %v1414
      %v1416 = vrot.slane %v1402, %v1415
      %v1417 = vcombine.low %v1352, %v1368
      %v1418 = vcombine.high %v1352, %v1368
      %v1420 = vunpack.c.l.s4 1934713408
      %v1421 = vunpack.c.0.s8 %v1420
      %v1422 = vlaneseq
      %v1423 = vshrl.u32 %v1422, 7
      %v1424 = vsub.s32 %v1421, %v1423
      %v1425 = vrot.slane %v1417, %v1424
      %v1427 = vunpack.c.l.s4 1934713408
      %v1428 = vunpack.c.0.s8 %v1427
      %v1429 = vlaneseq
      %v1430 = vshrl.u32 %v1429, 7
      %v1431 = vsub.s32 %v1428, %v1430
      %v1432 = vrot.slane %v1418, %v1431
      %v1433 = vcombine.low %v1377, %v1409
      %v1434 = vcombine.high %v1377, %v1409
      %v1435 = vcombine.low %v1384, %v1416
      %v1436 = vcombine.high %v1384, %v1416
      %v1437 = vcombine.low %v1393, %v1425
      %v1438 = vcombine.high %v1393, %v1425
      %v1439 = vcombine.low %v1400, %v1432
      %v1440 = vcombine.high %v1400, %v1432
      %1443 = vrot.lane.b32.xlu0 %v482, 32
      %v1444 = vpop.permute.xlu0 %1443
      %1445 = vrot.lane.b32.xlu0 %v618, 32
      %v1446 = vpop.permute.xlu0 %1445
      %1451 = vrot.lane.b32.xlu0 %v483, 64
      %v1452 = vpop.permute.xlu0 %1451
      %1453 = vrot.lane.b32.xlu0 %v619, 64
      %v1454 = vpop.permute.xlu0 %1453
      %1459 = vrot.lane.b32.xlu0 %v484, 96
      %v1460 = vpop.permute.xlu0 %1459
      %1461 = vrot.lane.b32.xlu0 %v620, 96
      %v1462 = vpop.permute.xlu0 %1461
      %1467 = vrot.lane.b32.xlu0 %v486, 32
      %v1468 = vpop.permute.xlu0 %1467
      %1469 = vrot.lane.b32.xlu0 %v622, 32
      %v1470 = vpop.permute.xlu0 %1469
      %1475 = vrot.lane.b32.xlu0 %v487, 64
      %v1476 = vpop.permute.xlu0 %1475
      %1477 = vrot.lane.b32.xlu0 %v623, 64
      %v1478 = vpop.permute.xlu0 %1477
      %1483 = vrot.lane.b32.xlu0 %v488, 96
      %v1484 = vpop.permute.xlu0 %1483
      %1485 = vrot.lane.b32.xlu0 %v624, 96
      %v1486 = vpop.permute.xlu0 %1485
      %1491 = vrot.lane.b32.xlu0 %v754, 32
      %v1492 = vpop.permute.xlu0 %1491
      %1493 = vrot.lane.b32.xlu0 %v890, 32
      %v1494 = vpop.permute.xlu0 %1493
      %1499 = vrot.lane.b32.xlu0 %v755, 64
      %v1500 = vpop.permute.xlu0 %1499
      %1501 = vrot.lane.b32.xlu0 %v891, 64
      %v1502 = vpop.permute.xlu0 %1501
      %1507 = vrot.lane.b32.xlu0 %v756, 96
      %v1508 = vpop.permute.xlu0 %1507
      %1509 = vrot.lane.b32.xlu0 %v892, 96
      %v1510 = vpop.permute.xlu0 %1509
      %1515 = vrot.lane.b32.xlu0 %v758, 32
      %v1516 = vpop.permute.xlu0 %1515
      %1517 = vrot.lane.b32.xlu0 %v894, 32
      %v1518 = vpop.permute.xlu0 %1517
      %1523 = vrot.lane.b32.xlu0 %v759, 64
      %v1524 = vpop.permute.xlu0 %1523
      %1525 = vrot.lane.b32.xlu0 %v895, 64
      %v1526 = vpop.permute.xlu0 %1525
      %1531 = vrot.lane.b32.xlu0 %v760, 96
      %v1532 = vpop.permute.xlu0 %1531
      %1533 = vrot.lane.b32.xlu0 %v896, 96
      %v1534 = vpop.permute.xlu0 %1533
      %1539 = vrot.lane.b32.xlu0 %v1026, 32
      %v1540 = vpop.permute.xlu0 %1539
      %1541 = vrot.lane.b32.xlu0 %v1162, 32
      %v1542 = vpop.permute.xlu0 %1541
      %1547 = vrot.lane.b32.xlu0 %v1027, 64
      %v1548 = vpop.permute.xlu0 %1547
      %1549 = vrot.lane.b32.xlu0 %v1163, 64
      %v1550 = vpop.permute.xlu0 %1549
      %1555 = vrot.lane.b32.xlu0 %v1028, 96
      %v1556 = vpop.permute.xlu0 %1555
      %1557 = vrot.lane.b32.xlu0 %v1164, 96
      %v1558 = vpop.permute.xlu0 %1557
      %1563 = vrot.lane.b32.xlu0 %v1030, 32
      %v1564 = vpop.permute.xlu0 %1563
      %1565 = vrot.lane.b32.xlu0 %v1166, 32
      %v1566 = vpop.permute.xlu0 %1565
      %1571 = vrot.lane.b32.xlu0 %v1031, 64
      %v1572 = vpop.permute.xlu0 %1571
      %1573 = vrot.lane.b32.xlu0 %v1167, 64
      %v1574 = vpop.permute.xlu0 %1573
      %1579 = vrot.lane.b32.xlu0 %v1032, 96
      %v1580 = vpop.permute.xlu0 %1579
      %1581 = vrot.lane.b32.xlu0 %v1168, 96
      %v1582 = vpop.permute.xlu0 %1581
      %1587 = vrot.lane.b32.xlu0 %v1298, 32
      %v1588 = vpop.permute.xlu0 %1587
      %1589 = vrot.lane.b32.xlu0 %v1434, 32
      %v1590 = vpop.permute.xlu0 %1589
      %1595 = vrot.lane.b32.xlu0 %v1299, 64
      %v1596 = vpop.permute.xlu0 %1595
      %1597 = vrot.lane.b32.xlu0 %v1435, 64
      %v1598 = vpop.permute.xlu0 %1597
      %1603 = vrot.lane.b32.xlu0 %v1300, 96
      %v1604 = vpop.permute.xlu0 %1603
      %1605 = vrot.lane.b32.xlu0 %v1436, 96
      %v1606 = vpop.permute.xlu0 %1605
      %1611 = vrot.lane.b32.xlu0 %v1302, 32
      %v1612 = vpop.permute.xlu0 %1611
      %1613 = vrot.lane.b32.xlu0 %v1438, 32
      %v1614 = vpop.permute.xlu0 %1613
      %1619 = vrot.lane.b32.xlu0 %v1303, 64
      %v1620 = vpop.permute.xlu0 %1619
      %1621 = vrot.lane.b32.xlu0 %v1439, 64
      %v1622 = vpop.permute.xlu0 %1621
      %1627 = vrot.lane.b32.xlu0 %v1304, 96
      %v1628 = vpop.permute.xlu0 %1627
      %1629 = vrot.lane.b32.xlu0 %v1440, 96
      %v1630 = vpop.permute.xlu0 %1629
      %vm1633 = vcmask 261120
      %v1634 = vsel %vm1633, %v481, %v1444
      %v1635 = vsel %vm1633, %v617, %v1446
      %vm1636 = vcmask 523264
      %v1637 = vsel %vm1636, %v1634, %v1452
      %v1638 = vsel %vm1636, %v1635, %v1454
      %vm1639 = vcmask 785408
      %v1640 = vsel %vm1639, %v1637, %v1460
      %v1641 = vsel %vm1639, %v1638, %v1462
      %v1642 = vsel %vm1633, %v485, %v1468
      %v1643 = vsel %vm1633, %v621, %v1470
      %v1644 = vsel %vm1636, %v1642, %v1476
      %v1645 = vsel %vm1636, %v1643, %v1478
      %v1646 = vsel %vm1639, %v1644, %v1484
      %v1647 = vsel %vm1639, %v1645, %v1486
      %v1648 = vsel %vm1633, %v753, %v1492
      %v1649 = vsel %vm1633, %v889, %v1494
      %v1650 = vsel %vm1636, %v1648, %v1500
      %v1651 = vsel %vm1636, %v1649, %v1502
      %v1652 = vsel %vm1639, %v1650, %v1508
      %v1653 = vsel %vm1639, %v1651, %v1510
      %v1654 = vsel %vm1633, %v757, %v1516
      %v1655 = vsel %vm1633, %v893, %v1518
      %v1656 = vsel %vm1636, %v1654, %v1524
      %v1657 = vsel %vm1636, %v1655, %v1526
      %v1658 = vsel %vm1639, %v1656, %v1532
      %v1659 = vsel %vm1639, %v1657, %v1534
      %v1660 = vsel %vm1633, %v1025, %v1540
      %v1661 = vsel %vm1633, %v1161, %v1542
      %v1662 = vsel %vm1636, %v1660, %v1548
      %v1663 = vsel %vm1636, %v1661, %v1550
      %v1664 = vsel %vm1639, %v1662, %v1556
      %v1665 = vsel %vm1639, %v1663, %v1558
      %v1666 = vsel %vm1633, %v1029, %v1564
      %v1667 = vsel %vm1633, %v1165, %v1566
      %v1668 = vsel %vm1636, %v1666, %v1572
      %v1669 = vsel %vm1636, %v1667, %v1574
      %v1670 = vsel %vm1639, %v1668, %v1580
      %v1671 = vsel %vm1639, %v1669, %v1582
      %v1672 = vsel %vm1633, %v1297, %v1588
      %v1673 = vsel %vm1633, %v1433, %v1590
      %v1674 = vsel %vm1636, %v1672, %v1596
      %v1675 = vsel %vm1636, %v1673, %v1598
      %v1676 = vsel %vm1639, %v1674, %v1604
      %v1677 = vsel %vm1639, %v1675, %v1606
      %v1678 = vsel %vm1633, %v1301, %v1612
      %v1679 = vsel %vm1633, %v1437, %v1614
      %v1680 = vsel %vm1636, %v1678, %v1620
      %v1681 = vsel %vm1636, %v1679, %v1622
      %v1682 = vsel %vm1639, %v1680, %v1628
      %v1683 = vsel %vm1639, %v1681, %v1630
      %1686 = vrot.lane.b32.xlu0 %v47, 32
      %v1687 = vpop.permute.xlu0 %1686
      %1688 = vrot.lane.b32.xlu0 %v48, 32
      %v1689 = vpop.permute.xlu0 %1688
      %1692 = vrot.lane.b32.xlu0 %v47, 64
      %v1693 = vpop.permute.xlu0 %1692
      %1694 = vrot.lane.b32.xlu0 %v48, 64
      %v1695 = vpop.permute.xlu0 %1694
      %1698 = vrot.lane.b32.xlu0 %v47, 96
      %v1699 = vpop.permute.xlu0 %1698
      %1700 = vrot.lane.b32.xlu0 %v48, 96
      %v1701 = vpop.permute.xlu0 %1700
      %v1704 = vsel %vm1633, %v47, %v1687
      %v1705 = vsel %vm1633, %v48, %v1689
      %v1706 = vsel %vm1636, %v1704, %v1693
      %v1707 = vsel %vm1636, %v1705, %v1695
      %v1708 = vsel %vm1639, %v1706, %v1699
      %v1709 = vsel %vm1639, %v1707, %v1701
      %v1710 = vmul.f32 %v1640, %v1708
      %v1711 = vmul.f32 %v1646, %v1708
      %v1712 = vmul.f32 %v1652, %v1708
      %v1713 = vmul.f32 %v1658, %v1708
      %v1714 = vmul.f32 %v1664, %v1708
      %v1715 = vmul.f32 %v1670, %v1708
      %v1716 = vmul.f32 %v1676, %v1708
      %v1717 = vmul.f32 %v1682, %v1708
      %v1718 = vmul.f32 %v1641, %v1709
      %v1719 = vmul.f32 %v1647, %v1709
      %v1720 = vmul.f32 %v1653, %v1709
      %v1721 = vmul.f32 %v1659, %v1709
      %v1722 = vmul.f32 %v1665, %v1709
      %v1723 = vmul.f32 %v1671, %v1709
      %v1724 = vmul.f32 %v1677, %v1709
      %v1725 = vmul.f32 %v1683, %v1709
      %v1726 = vpack.c.bf16 %v1718, %v1710
      %v1727 = vpack.c.bf16 %v1719, %v1711
      %v1728 = vpack.c.bf16 %v1720, %v1712
      %v1729 = vpack.c.bf16 %v1721, %v1713
      %v1730 = vpack.c.bf16 %v1722, %v1714
      %v1731 = vpack.c.bf16 %v1723, %v1715
      %v1732 = vpack.c.bf16 %v1724, %v1716
      %v1733 = vpack.c.bf16 %v1725, %v1717
      %v1742 = vunpack.c.l.b16 %v1726
      %v1743 = vunpack.c.l.b16 %v1727
      %v1744 = vunpack.c.l.b16 %v1728
      %v1745 = vunpack.c.l.b16 %v1729
      %v1746 = vunpack.c.l.b16 %v1730
      %v1747 = vunpack.c.l.b16 %v1731
      %v1748 = vunpack.c.l.b16 %v1732
      %v1749 = vunpack.c.l.b16 %v1733
      %v1750 = vunpack.c.h.b16 %v1726
      %v1751 = vunpack.c.h.b16 %v1727
      %v1752 = vunpack.c.h.b16 %v1728
      %v1753 = vunpack.c.h.b16 %v1729
      %v1754 = vunpack.c.h.b16 %v1730
      %v1755 = vunpack.c.h.b16 %v1731
      %v1756 = vunpack.c.h.b16 %v1732
      %v1757 = vunpack.c.h.b16 %v1733
      %v1758 = vpack.c.b16 %v1743, %v1742
      %v1759 = vpack.c.b16 %v1745, %v1744
      %v1760 = vpack.c.b16 %v1747, %v1746
      %v1761 = vpack.c.b16 %v1749, %v1748
      %v1762 = vpack.c.b16 %v1751, %v1750
      %v1763 = vpack.c.b16 %v1753, %v1752
      %v1764 = vpack.c.b16 %v1755, %v1754
      %v1765 = vpack.c.b16 %v1757, %v1756
      %1774 = vst [vmem:[#allocation3] sm:$0xff] %v1758
      %1775 = vst [vmem:[#allocation3 + $0x8] sm:$0xff] %v1759
      %1776 = vst [vmem:[#allocation3 + $0x10] sm:$0xff] %v1760
      %1777 = vst [vmem:[#allocation3 + $0x18] sm:$0xff] %v1761
      %1778 = vst [vmem:[#allocation3 + $0x20] sm:$0xff] %v1762
      %1779 = vst [vmem:[#allocation3 + $0x28] sm:$0xff] %v1763
      %1780 = vst [vmem:[#allocation3 + $0x30] sm:$0xff] %v1764
      %1781 = vst [vmem:[#allocation3 + $0x38] sm:$0xff] %v1765
    $region33: #{bilinear_classification_head.1} parent=1 // pred_fallthru
      _
    %v1782 = vld [vmem:[#allocation3] sm:$0xff]
    %v1783 = vld [vmem:[#allocation3 + $0x8] sm:$0xff]
    %v1784 = vld [vmem:[#allocation3 + $0x10] sm:$0xff]
    %v1785 = vld [vmem:[#allocation3 + $0x18] sm:$0xff]
    %v1786 = vld [vmem:[#allocation3 + $0x20] sm:$0xff]
    %v1787 = vld [vmem:[#allocation3 + $0x28] sm:$0xff]
    %v1788 = vld [vmem:[#allocation3 + $0x30] sm:$0xff]
    %v1789 = vld [vmem:[#allocation3 + $0x38] sm:$0xff]
    %v1790 = vld [vmem:[#allocation4] sm:$0xf]
    %v1791 = vld [vmem:[#allocation4 + $0x4] sm:$0xf]
    %v1792 = vld [vmem:[#allocation4 + $0x8] sm:$0xf]
    %v1793 = vld [vmem:[#allocation4 + $0xc] sm:$0xf]
    %v1794 = vld [vmem:[#allocation4 + $0x10] sm:$0xf]
    %v1795 = vld [vmem:[#allocation4 + $0x14] sm:$0xf]
    %v1796 = vld [vmem:[#allocation4 + $0x18] sm:$0xf]
    %v1797 = vld [vmem:[#allocation4 + $0x1c] sm:$0xf]
    %v1798 = vld [vmem:[#allocation4 + $0x20] sm:$0xf]
    %v1799 = vld [vmem:[#allocation4 + $0x24] sm:$0xf]
    %v1800 = vld [vmem:[#allocation4 + $0x28] sm:$0xf]
    %v1801 = vld [vmem:[#allocation4 + $0x2c] sm:$0xf]
    %v1802 = vld [vmem:[#allocation4 + $0x30] sm:$0xf]
    %v1803 = vld [vmem:[#allocation4 + $0x34] sm:$0xf]
    %v1804 = vld [vmem:[#allocation4 + $0x38] sm:$0xf]
    %v1805 = vld [vmem:[#allocation4 + $0x3c] sm:$0xf]
    %v1806 = vld [vmem:[#allocation4 + $0x40] sm:$0xf]
    %v1807 = vld [vmem:[#allocation4 + $0x44] sm:$0xf]
    %v1808 = vld [vmem:[#allocation4 + $0x48] sm:$0xf]
    %v1809 = vld [vmem:[#allocation4 + $0x4c] sm:$0xf]
    %v1810 = vld [vmem:[#allocation4 + $0x50] sm:$0xf]
    %v1811 = vld [vmem:[#allocation4 + $0x54] sm:$0xf]
    %v1812 = vld [vmem:[#allocation4 + $0x58] sm:$0xf]
    %v1813 = vld [vmem:[#allocation4 + $0x5c] sm:$0xf]
    %v1814 = vld [vmem:[#allocation4 + $0x60] sm:$0xf]
    %v1815 = vld [vmem:[#allocation4 + $0x64] sm:$0xf]
    %v1816 = vld [vmem:[#allocation4 + $0x68] sm:$0xf]
    %v1817 = vld [vmem:[#allocation4 + $0x6c] sm:$0xf]
    %v1818 = vld [vmem:[#allocation4 + $0x70] sm:$0xf]
    %v1819 = vld [vmem:[#allocation4 + $0x74] sm:$0xf]
    %v1820 = vld [vmem:[#allocation4 + $0x78] sm:$0xf]
    %v1821 = vld [vmem:[#allocation4 + $0x7c] sm:$0xf]
    %v1822 = vld [vmem:[#allocation4 + $0x80] sm:$0xf]
    %v1823 = vld [vmem:[#allocation4 + $0x84] sm:$0xf]
    %v1824 = vld [vmem:[#allocation4 + $0x88] sm:$0xf]
    %v1825 = vld [vmem:[#allocation4 + $0x8c] sm:$0xf]
    %v1826 = vld [vmem:[#allocation4 + $0x90] sm:$0xf]
    %v1827 = vld [vmem:[#allocation4 + $0x94] sm:$0xf]
    %v1828 = vld [vmem:[#allocation4 + $0x98] sm:$0xf]
    %v1829 = vld [vmem:[#allocation4 + $0x9c] sm:$0xf]
    %v1830 = vld [vmem:[#allocation4 + $0xa0] sm:$0xf]
    %v1831 = vld [vmem:[#allocation4 + $0xa4] sm:$0xf]
    %v1832 = vld [vmem:[#allocation4 + $0xa8] sm:$0xf]
    %v1833 = vld [vmem:[#allocation4 + $0xac] sm:$0xf]
    %v1834 = vld [vmem:[#allocation4 + $0xb0] sm:$0xf]
    %v1835 = vld [vmem:[#allocation4 + $0xb4] sm:$0xf]
    %v1836 = vld [vmem:[#allocation4 + $0xb8] sm:$0xf]
    %v1837 = vld [vmem:[#allocation4 + $0xbc] sm:$0xf]
    %v1838 = vld [vmem:[#allocation4 + $0xc0] sm:$0xf]
    %v1839 = vld [vmem:[#allocation4 + $0xc4] sm:$0xf]
    %v1840 = vld [vmem:[#allocation4 + $0xc8] sm:$0xf]
    %v1841 = vld [vmem:[#allocation4 + $0xcc] sm:$0xf]
    %v1842 = vld [vmem:[#allocation4 + $0xd0] sm:$0xf]
    %v1843 = vld [vmem:[#allocation4 + $0xd4] sm:$0xf]
    %v1844 = vld [vmem:[#allocation4 + $0xd8] sm:$0xf]
    %v1845 = vld [vmem:[#allocation4 + $0xdc] sm:$0xf]
    %v1846 = vld [vmem:[#allocation4 + $0xe0] sm:$0xf]
    %v1847 = vld [vmem:[#allocation4 + $0xe4] sm:$0xf]
    %v1848 = vld [vmem:[#allocation4 + $0xe8] sm:$0xf]
    %v1849 = vld [vmem:[#allocation4 + $0xec] sm:$0xf]
    %v1850 = vld [vmem:[#allocation4 + $0xf0] sm:$0xf]
    %v1851 = vld [vmem:[#allocation4 + $0xf4] sm:$0xf]
    %v1852 = vld [vmem:[#allocation4 + $0xf8] sm:$0xf]
    %v1853 = vld [vmem:[#allocation4 + $0xfc] sm:$0xf]
    %v1854 = vld [vmem:[#allocation4 + $0x100] sm:$0xf]
    %v1855 = vld [vmem:[#allocation4 + $0x104] sm:$0xf]
    %v1856 = vld [vmem:[#allocation4 + $0x108] sm:$0xf]
    %v1857 = vld [vmem:[#allocation4 + $0x10c] sm:$0xf]
    %v1858 = vld [vmem:[#allocation4 + $0x110] sm:$0xf]
    %v1859 = vld [vmem:[#allocation4 + $0x114] sm:$0xf]
    %v1860 = vld [vmem:[#allocation4 + $0x118] sm:$0xf]
    %v1861 = vld [vmem:[#allocation4 + $0x11c] sm:$0xf]
    %v1862 = vld [vmem:[#allocation4 + $0x120] sm:$0xf]
    %v1863 = vld [vmem:[#allocation4 + $0x124] sm:$0xf]
    %v1864 = vld [vmem:[#allocation4 + $0x128] sm:$0xf]
    %v1865 = vld [vmem:[#allocation4 + $0x12c] sm:$0xf]
    %v1866 = vld [vmem:[#allocation4 + $0x130] sm:$0xf]
    %v1867 = vld [vmem:[#allocation4 + $0x134] sm:$0xf]
    %v1868 = vld [vmem:[#allocation4 + $0x138] sm:$0xf]
    %v1869 = vld [vmem:[#allocation4 + $0x13c] sm:$0xf]
    %v1870 = vld [vmem:[#allocation4 + $0x140] sm:$0xf]
    %v1871 = vld [vmem:[#allocation4 + $0x144] sm:$0xf]
    %v1872 = vld [vmem:[#allocation4 + $0x148] sm:$0xf]
    %v1873 = vld [vmem:[#allocation4 + $0x14c] sm:$0xf]
    %v1874 = vld [vmem:[#allocation4 + $0x150] sm:$0xf]
    %v1875 = vld [vmem:[#allocation4 + $0x154] sm:$0xf]
    %v1876 = vld [vmem:[#allocation4 + $0x158] sm:$0xf]
    %v1877 = vld [vmem:[#allocation4 + $0x15c] sm:$0xf]
    %v1878 = vld [vmem:[#allocation4 + $0x160] sm:$0xf]
    %v1879 = vld [vmem:[#allocation4 + $0x164] sm:$0xf]
    %v1880 = vld [vmem:[#allocation4 + $0x168] sm:$0xf]
    %v1881 = vld [vmem:[#allocation4 + $0x16c] sm:$0xf]
    %v1882 = vld [vmem:[#allocation4 + $0x170] sm:$0xf]
    %v1883 = vld [vmem:[#allocation4 + $0x174] sm:$0xf]
    %v1884 = vld [vmem:[#allocation4 + $0x178] sm:$0xf]
    %v1885 = vld [vmem:[#allocation4 + $0x17c] sm:$0xf]
    %v1886 = vld [vmem:[#allocation4 + $0x180] sm:$0xf]
    %v1887 = vld [vmem:[#allocation4 + $0x184] sm:$0xf]
    %v1888 = vld [vmem:[#allocation4 + $0x188] sm:$0xf]
    %v1889 = vld [vmem:[#allocation4 + $0x18c] sm:$0xf]
    %v1890 = vld [vmem:[#allocation4 + $0x190] sm:$0xf]
    %v1891 = vld [vmem:[#allocation4 + $0x194] sm:$0xf]
    %v1892 = vld [vmem:[#allocation4 + $0x198] sm:$0xf]
    %v1893 = vld [vmem:[#allocation4 + $0x19c] sm:$0xf]
    %v1894 = vld [vmem:[#allocation4 + $0x1a0] sm:$0xf]
    %v1895 = vld [vmem:[#allocation4 + $0x1a4] sm:$0xf]
    %v1896 = vld [vmem:[#allocation4 + $0x1a8] sm:$0xf]
    %v1897 = vld [vmem:[#allocation4 + $0x1ac] sm:$0xf]
    %v1898 = vld [vmem:[#allocation4 + $0x1b0] sm:$0xf]
    %v1899 = vld [vmem:[#allocation4 + $0x1b4] sm:$0xf]
    %v1900 = vld [vmem:[#allocation4 + $0x1b8] sm:$0xf]
    %v1901 = vld [vmem:[#allocation4 + $0x1bc] sm:$0xf]
    %v1902 = vld [vmem:[#allocation4 + $0x1c0] sm:$0xf]
    %v1903 = vld [vmem:[#allocation4 + $0x1c4] sm:$0xf]
    %v1904 = vld [vmem:[#allocation4 + $0x1c8] sm:$0xf]
    %v1905 = vld [vmem:[#allocation4 + $0x1cc] sm:$0xf]
    %v1906 = vld [vmem:[#allocation4 + $0x1d0] sm:$0xf]
    %v1907 = vld [vmem:[#allocation4 + $0x1d4] sm:$0xf]
    %v1908 = vld [vmem:[#allocation4 + $0x1d8] sm:$0xf]
    %v1909 = vld [vmem:[#allocation4 + $0x1dc] sm:$0xf]
    %v1910 = vld [vmem:[#allocation4 + $0x1e0] sm:$0xf]
    %v1911 = vld [vmem:[#allocation4 + $0x1e4] sm:$0xf]
    %v1912 = vld [vmem:[#allocation4 + $0x1e8] sm:$0xf]
    %v1913 = vld [vmem:[#allocation4 + $0x1ec] sm:$0xf]
    %v1914 = vld [vmem:[#allocation4 + $0x1f0] sm:$0xf]
    %v1915 = vld [vmem:[#allocation4 + $0x1f4] sm:$0xf]
    %v1916 = vld [vmem:[#allocation4 + $0x1f8] sm:$0xf]
    %v1917 = vld [vmem:[#allocation4 + $0x1fc] sm:$0xf]
    %v1918 = vld [vmem:[%s3] sm:$0x1]
    %v1920 = vlaneseq
    %v1921 = vshrl.u32 %v1920, 7
    %v1922 = vsub.s32 0, %v1921
    %v1923 = vrot.slane %v1918, %v1922
    %v1933 = vunpack.c.l.b16 %v1782
    %v1934 = vunpack.c.h.b16 %v1782
    %v1935 = vunpack.c.l.b16 %v1783
    %v1936 = vunpack.c.h.b16 %v1783
    %v1937 = vunpack.c.l.b16 %v1784
    %v1938 = vunpack.c.h.b16 %v1784
    %v1939 = vunpack.c.l.b16 %v1785
    %v1940 = vunpack.c.h.b16 %v1785
    %v1941 = vunpack.c.l.b16 %v1786
    %v1942 = vunpack.c.h.b16 %v1786
    %v1943 = vunpack.c.l.b16 %v1787
    %v1944 = vunpack.c.h.b16 %v1787
    %v1945 = vunpack.c.l.b16 %v1788
    %v1946 = vunpack.c.h.b16 %v1788
    %v1947 = vunpack.c.l.b16 %v1789
    %v1948 = vunpack.c.h.b16 %v1789
    %v1949 = vpack.c.b16 %v1941, %v1933
    %v1950 = vpack.c.b16 %v1942, %v1934
    %v1951 = vpack.c.b16 %v1943, %v1935
    %v1952 = vpack.c.b16 %v1944, %v1936
    %v1953 = vpack.c.b16 %v1945, %v1937
    %v1954 = vpack.c.b16 %v1946, %v1938
    %v1955 = vpack.c.b16 %v1947, %v1939
    %v1956 = vpack.c.b16 %v1948, %v1940
    %v2093 = vunpack.c.l.b16 %v1790
    %v2094 = vunpack.c.l.b16 %v1791
    %v2095 = vunpack.c.l.b16 %v1792
    %v2096 = vunpack.c.l.b16 %v1793
    %v2097 = vunpack.c.l.b16 %v1794
    %v2098 = vunpack.c.l.b16 %v1795
    %v2099 = vunpack.c.l.b16 %v1796
    %v2100 = vunpack.c.l.b16 %v1797
    %v2101 = vunpack.c.l.b16 %v1798
    %v2102 = vunpack.c.l.b16 %v1799
    %v2103 = vunpack.c.l.b16 %v1800
    %v2104 = vunpack.c.l.b16 %v1801
    %v2105 = vunpack.c.l.b16 %v1802
    %v2106 = vunpack.c.l.b16 %v1803
    %v2107 = vunpack.c.l.b16 %v1804
    %v2108 = vunpack.c.l.b16 %v1805
    %v2109 = vunpack.c.l.b16 %v1806
    %v2110 = vunpack.c.l.b16 %v1807
    %v2111 = vunpack.c.l.b16 %v1808
    %v2112 = vunpack.c.l.b16 %v1809
    %v2113 = vunpack.c.l.b16 %v1810
    %v2114 = vunpack.c.l.b16 %v1811
    %v2115 = vunpack.c.l.b16 %v1812
    %v2116 = vunpack.c.l.b16 %v1813
    %v2117 = vunpack.c.l.b16 %v1814
    %v2118 = vunpack.c.l.b16 %v1815
    %v2119 = vunpack.c.l.b16 %v1816
    %v2120 = vunpack.c.l.b16 %v1817
    %v2121 = vunpack.c.l.b16 %v1818
    %v2122 = vunpack.c.l.b16 %v1819
    %v2123 = vunpack.c.l.b16 %v1820
    %v2124 = vunpack.c.l.b16 %v1821
    %v2125 = vunpack.c.l.b16 %v1822
    %v2126 = vunpack.c.l.b16 %v1823
    %v2127 = vunpack.c.l.b16 %v1824
    %v2128 = vunpack.c.l.b16 %v1825
    %v2129 = vunpack.c.l.b16 %v1826
    %v2130 = vunpack.c.l.b16 %v1827
    %v2131 = vunpack.c.l.b16 %v1828
    %v2132 = vunpack.c.l.b16 %v1829
    %v2133 = vunpack.c.l.b16 %v1830
    %v2134 = vunpack.c.l.b16 %v1831
    %v2135 = vunpack.c.l.b16 %v1832
    %v2136 = vunpack.c.l.b16 %v1833
    %v2137 = vunpack.c.l.b16 %v1834
    %v2138 = vunpack.c.l.b16 %v1835
    %v2139 = vunpack.c.l.b16 %v1836
    %v2140 = vunpack.c.l.b16 %v1837
    %v2141 = vunpack.c.l.b16 %v1838
    %v2142 = vunpack.c.l.b16 %v1839
    %v2143 = vunpack.c.l.b16 %v1840
    %v2144 = vunpack.c.l.b16 %v1841
    %v2145 = vunpack.c.l.b16 %v1842
    %v2146 = vunpack.c.l.b16 %v1843
    %v2147 = vunpack.c.l.b16 %v1844
    %v2148 = vunpack.c.l.b16 %v1845
    %v2149 = vunpack.c.l.b16 %v1846
    %v2150 = vunpack.c.l.b16 %v1847
    %v2151 = vunpack.c.l.b16 %v1848
    %v2152 = vunpack.c.l.b16 %v1849
    %v2153 = vunpack.c.l.b16 %v1850
    %v2154 = vunpack.c.l.b16 %v1851
    %v2155 = vunpack.c.l.b16 %v1852
    %v2156 = vunpack.c.l.b16 %v1853
    %v2157 = vunpack.c.l.b16 %v1854
    %v2158 = vunpack.c.l.b16 %v1855
    %v2159 = vunpack.c.l.b16 %v1856
    %v2160 = vunpack.c.l.b16 %v1857
    %v2161 = vunpack.c.l.b16 %v1858
    %v2162 = vunpack.c.l.b16 %v1859
    %v2163 = vunpack.c.l.b16 %v1860
    %v2164 = vunpack.c.l.b16 %v1861
    %v2165 = vunpack.c.l.b16 %v1862
    %v2166 = vunpack.c.l.b16 %v1863
    %v2167 = vunpack.c.l.b16 %v1864
    %v2168 = vunpack.c.l.b16 %v1865
    %v2169 = vunpack.c.l.b16 %v1866
    %v2170 = vunpack.c.l.b16 %v1867
    %v2171 = vunpack.c.l.b16 %v1868
    %v2172 = vunpack.c.l.b16 %v1869
    %v2173 = vunpack.c.l.b16 %v1870
    %v2174 = vunpack.c.l.b16 %v1871
    %v2175 = vunpack.c.l.b16 %v1872
    %v2176 = vunpack.c.l.b16 %v1873
    %v2177 = vunpack.c.l.b16 %v1874
    %v2178 = vunpack.c.l.b16 %v1875
    %v2179 = vunpack.c.l.b16 %v1876
    %v2180 = vunpack.c.l.b16 %v1877
    %v2181 = vunpack.c.l.b16 %v1878
    %v2182 = vunpack.c.l.b16 %v1879
    %v2183 = vunpack.c.l.b16 %v1880
    %v2184 = vunpack.c.l.b16 %v1881
    %v2185 = vunpack.c.l.b16 %v1882
    %v2186 = vunpack.c.l.b16 %v1883
    %v2187 = vunpack.c.l.b16 %v1884
    %v2188 = vunpack.c.l.b16 %v1885
    %v2189 = vunpack.c.l.b16 %v1886
    %v2190 = vunpack.c.l.b16 %v1887
    %v2191 = vunpack.c.l.b16 %v1888
    %v2192 = vunpack.c.l.b16 %v1889
    %v2193 = vunpack.c.l.b16 %v1890
    %v2194 = vunpack.c.l.b16 %v1891
    %v2195 = vunpack.c.l.b16 %v1892
    %v2196 = vunpack.c.l.b16 %v1893
    %v2197 = vunpack.c.l.b16 %v1894
    %v2198 = vunpack.c.l.b16 %v1895
    %v2199 = vunpack.c.l.b16 %v1896
    %v2200 = vunpack.c.l.b16 %v1897
    %v2201 = vunpack.c.l.b16 %v1898
    %v2202 = vunpack.c.l.b16 %v1899
    %v2203 = vunpack.c.l.b16 %v1900
    %v2204 = vunpack.c.l.b16 %v1901
    %v2205 = vunpack.c.l.b16 %v1902
    %v2206 = vunpack.c.l.b16 %v1903
    %v2207 = vunpack.c.l.b16 %v1904
    %v2208 = vunpack.c.l.b16 %v1905
    %v2209 = vunpack.c.l.b16 %v1906
    %v2210 = vunpack.c.l.b16 %v1907
    %v2211 = vunpack.c.l.b16 %v1908
    %v2212 = vunpack.c.l.b16 %v1909
    %v2213 = vunpack.c.l.b16 %v1910
    %v2214 = vunpack.c.l.b16 %v1911
    %v2215 = vunpack.c.l.b16 %v1912
    %v2216 = vunpack.c.l.b16 %v1913
    %v2217 = vunpack.c.l.b16 %v1914
    %v2218 = vunpack.c.l.b16 %v1915
    %v2219 = vunpack.c.l.b16 %v1916
    %v2220 = vunpack.c.l.b16 %v1917
    %v2221 = vpack.c.b16 %v2094, %v2093
    %v2222 = vpack.c.b16 %v2096, %v2095
    %v2223 = vpack.c.b16 %v2098, %v2097
    %v2224 = vpack.c.b16 %v2100, %v2099
    %v2225 = vpack.c.b16 %v2102, %v2101
    %v2226 = vpack.c.b16 %v2104, %v2103
    %v2227 = vpack.c.b16 %v2106, %v2105
    %v2228 = vpack.c.b16 %v2108, %v2107
    %v2229 = vpack.c.b16 %v2110, %v2109
    %v2230 = vpack.c.b16 %v2112, %v2111
    %v2231 = vpack.c.b16 %v2114, %v2113
    %v2232 = vpack.c.b16 %v2116, %v2115
    %v2233 = vpack.c.b16 %v2118, %v2117
    %v2234 = vpack.c.b16 %v2120, %v2119
    %v2235 = vpack.c.b16 %v2122, %v2121
    %v2236 = vpack.c.b16 %v2124, %v2123
    %v2237 = vpack.c.b16 %v2126, %v2125
    %v2238 = vpack.c.b16 %v2128, %v2127
    %v2239 = vpack.c.b16 %v2130, %v2129
    %v2240 = vpack.c.b16 %v2132, %v2131
    %v2241 = vpack.c.b16 %v2134, %v2133
    %v2242 = vpack.c.b16 %v2136, %v2135
    %v2243 = vpack.c.b16 %v2138, %v2137
    %v2244 = vpack.c.b16 %v2140, %v2139
    %v2245 = vpack.c.b16 %v2142, %v2141
    %v2246 = vpack.c.b16 %v2144, %v2143
    %v2247 = vpack.c.b16 %v2146, %v2145
    %v2248 = vpack.c.b16 %v2148, %v2147
    %v2249 = vpack.c.b16 %v2150, %v2149
    %v2250 = vpack.c.b16 %v2152, %v2151
    %v2251 = vpack.c.b16 %v2154, %v2153
    %v2252 = vpack.c.b16 %v2156, %v2155
    %v2253 = vpack.c.b16 %v2158, %v2157
    %v2254 = vpack.c.b16 %v2160, %v2159
    %v2255 = vpack.c.b16 %v2162, %v2161
    %v2256 = vpack.c.b16 %v2164, %v2163
    %v2257 = vpack.c.b16 %v2166, %v2165
    %v2258 = vpack.c.b16 %v2168, %v2167
    %v2259 = vpack.c.b16 %v2170, %v2169
    %v2260 = vpack.c.b16 %v2172, %v2171
    %v2261 = vpack.c.b16 %v2174, %v2173
    %v2262 = vpack.c.b16 %v2176, %v2175
    %v2263 = vpack.c.b16 %v2178, %v2177
    %v2264 = vpack.c.b16 %v2180, %v2179
    %v2265 = vpack.c.b16 %v2182, %v2181
    %v2266 = vpack.c.b16 %v2184, %v2183
    %v2267 = vpack.c.b16 %v2186, %v2185
    %v2268 = vpack.c.b16 %v2188, %v2187
    %v2269 = vpack.c.b16 %v2190, %v2189
    %v2270 = vpack.c.b16 %v2192, %v2191
    %v2271 = vpack.c.b16 %v2194, %v2193
    %v2272 = vpack.c.b16 %v2196, %v2195
    %v2273 = vpack.c.b16 %v2198, %v2197
    %v2274 = vpack.c.b16 %v2200, %v2199
    %v2275 = vpack.c.b16 %v2202, %v2201
    %v2276 = vpack.c.b16 %v2204, %v2203
    %v2277 = vpack.c.b16 %v2206, %v2205
    %v2278 = vpack.c.b16 %v2208, %v2207
    %v2279 = vpack.c.b16 %v2210, %v2209
    %v2280 = vpack.c.b16 %v2212, %v2211
    %v2281 = vpack.c.b16 %v2214, %v2213
    %v2282 = vpack.c.b16 %v2216, %v2215
    %v2283 = vpack.c.b16 %v2218, %v2217
    %v2284 = vpack.c.b16 %v2220, %v2219
    %2349 = vmatprep.subr.bf16.mxu0 0
    %2350 = vmatpush1.bf16.msra.mxu0 %v2228
    %2351 = vmatprep.subr.bf16.mxu0 0
    %2352 = vmatpush1.bf16.msra.mxu0 %v2227
    %2353 = vmatprep.subr.bf16.mxu0 0
    %2354 = vmatpush1.bf16.msra.mxu0 %v2226
    %2355 = vmatprep.subr.bf16.mxu0 0
    %2356 = vmatpush1.bf16.msra.mxu0 %v2225
    %2357 = vmatprep.subr.bf16.mxu0 0
    %2358 = vmatpush1.bf16.msra.mxu0 %v2224
    %2359 = vmatprep.subr.bf16.mxu0 0
    %2360 = vmatpush1.bf16.msra.mxu0 %v2223
    %2361 = vmatprep.subr.bf16.mxu0 0
    %2362 = vmatpush1.bf16.msra.mxu0 %v2222
    %2363 = vmatprep.subr.bf16.mxu0 0
    %2364 = vmatpush1.bf16.msra.mxu0 %v2221
    %2365 = vmatprep.subr.bf16.mxu0 0
    %2366 = vmatpush2.bf16.msra.mxu0 %v2236
    %2367 = vmatprep.subr.bf16.mxu0 0
    %2368 = vmatpush2.bf16.msra.mxu0 %v2235
    %2369 = vmatprep.subr.bf16.mxu0 0
    %2370 = vmatpush2.bf16.msra.mxu0 %v2234
    %2371 = vmatprep.subr.bf16.mxu0 0
    %2372 = vmatpush2.bf16.msra.mxu0 %v2233
    %2373 = vmatprep.subr.bf16.mxu0 0
    %2374 = vmatpush2.bf16.msra.mxu0 %v2232
    %2375 = vmatprep.subr.bf16.mxu0 0
    %2376 = vmatpush2.bf16.msra.mxu0 %v2231
    %2377 = vmatprep.subr.bf16.mxu0 0
    %2378 = vmatpush2.bf16.msra.mxu0 %v2230
    %2379 = vmatprep.subr.bf16.mxu0 0
    %2380 = vmatpush2.bf16.msra.mxu0 %v2229
    %2381 = vmatprep.mubr.bf16.mxu0 %v1950
    %2382 = vmatmul.mubr.bf16.gmra.mxu0 %v1949
    %v2383 = vpop.f32.mrf.mxu0
    %v2384 = vadd.f32 %v1923, %v2383
    %v2385 = vpop.f32.mrf.mxu0
    %v2386 = vpop.f32.mrf.mxu0
    %v2387 = vadd.f32 %v1923, %v2386
    %v2388 = vpop.f32.mrf.mxu0
    %2389 = vdwg.mxu0
    %2390 = vmatprep.subr.bf16.mxu0 0
    %2391 = vmatpush1.bf16.msra.mxu0 %v2244
    %2392 = vmatprep.subr.bf16.mxu0 0
    %2393 = vmatpush1.bf16.msra.mxu0 %v2243
    %2394 = vmatprep.subr.bf16.mxu0 0
    %2395 = vmatpush1.bf16.msra.mxu0 %v2242
    %2396 = vmatprep.subr.bf16.mxu0 0
    %2397 = vmatpush1.bf16.msra.mxu0 %v2241
    %2398 = vmatprep.subr.bf16.mxu0 0
    %2399 = vmatpush1.bf16.msra.mxu0 %v2240
    %2400 = vmatprep.subr.bf16.mxu0 0
    %2401 = vmatpush1.bf16.msra.mxu0 %v2239
    %2402 = vmatprep.subr.bf16.mxu0 0
    %2403 = vmatpush1.bf16.msra.mxu0 %v2238
    %2404 = vmatprep.subr.bf16.mxu0 0
    %2405 = vmatpush1.bf16.msra.mxu0 %v2237
    %2406 = vmatprep.subr.bf16.mxu0 0
    %2407 = vmatpush2.bf16.msra.mxu0 %v2252
    %2408 = vmatprep.subr.bf16.mxu0 0
    %2409 = vmatpush2.bf16.msra.mxu0 %v2251
    %2410 = vmatprep.subr.bf16.mxu0 0
    %2411 = vmatpush2.bf16.msra.mxu0 %v2250
    %2412 = vmatprep.subr.bf16.mxu0 0
    %2413 = vmatpush2.bf16.msra.mxu0 %v2249
    %2414 = vmatprep.subr.bf16.mxu0 0
    %2415 = vmatpush2.bf16.msra.mxu0 %v2248
    %2416 = vmatprep.subr.bf16.mxu0 0
    %2417 = vmatpush2.bf16.msra.mxu0 %v2247
    %2418 = vmatprep.subr.bf16.mxu0 0
    %2419 = vmatpush2.bf16.msra.mxu0 %v2246
    %2420 = vmatprep.subr.bf16.mxu0 0
    %2421 = vmatpush2.bf16.msra.mxu0 %v2245
    %2422 = vmatprep.mubr.bf16.mxu0 %v1952
    %2423 = vmatmul.mubr.bf16.gmra.mxu0 %v1951
    %v2424 = vpop.f32.mrf.mxu0
    %v2425 = vadd.f32 %v2384, %v2424
    %v2426 = vpop.f32.mrf.mxu0
    %v2427 = vpop.f32.mrf.mxu0
    %v2428 = vadd.f32 %v2387, %v2427
    %v2429 = vpop.f32.mrf.mxu0
    %2430 = vdwg.mxu0
    %2431 = vmatprep.subr.bf16.mxu0 0
    %2432 = vmatpush1.bf16.msra.mxu0 %v2260
    %2433 = vmatprep.subr.bf16.mxu0 0
    %2434 = vmatpush1.bf16.msra.mxu0 %v2259
    %2435 = vmatprep.subr.bf16.mxu0 0
    %2436 = vmatpush1.bf16.msra.mxu0 %v2258
    %2437 = vmatprep.subr.bf16.mxu0 0
    %2438 = vmatpush1.bf16.msra.mxu0 %v2257
    %2439 = vmatprep.subr.bf16.mxu0 0
    %2440 = vmatpush1.bf16.msra.mxu0 %v2256
    %2441 = vmatprep.subr.bf16.mxu0 0
    %2442 = vmatpush1.bf16.msra.mxu0 %v2255
    %2443 = vmatprep.subr.bf16.mxu0 0
    %2444 = vmatpush1.bf16.msra.mxu0 %v2254
    %2445 = vmatprep.subr.bf16.mxu0 0
    %2446 = vmatpush1.bf16.msra.mxu0 %v2253
    %2447 = vmatprep.subr.bf16.mxu0 0
    %2448 = vmatpush2.bf16.msra.mxu0 %v2268
    %2449 = vmatprep.subr.bf16.mxu0 0
    %2450 = vmatpush2.bf16.msra.mxu0 %v2267
    %2451 = vmatprep.subr.bf16.mxu0 0
    %2452 = vmatpush2.bf16.msra.mxu0 %v2266
    %2453 = vmatprep.subr.bf16.mxu0 0
    %2454 = vmatpush2.bf16.msra.mxu0 %v2265
    %2455 = vmatprep.subr.bf16.mxu0 0
    %2456 = vmatpush2.bf16.msra.mxu0 %v2264
    %2457 = vmatprep.subr.bf16.mxu0 0
    %2458 = vmatpush2.bf16.msra.mxu0 %v2263
    %2459 = vmatprep.subr.bf16.mxu0 0
    %2460 = vmatpush2.bf16.msra.mxu0 %v2262
    %2461 = vmatprep.subr.bf16.mxu0 0
    %2462 = vmatpush2.bf16.msra.mxu0 %v2261
    %2463 = vmatprep.mubr.bf16.mxu0 %v1954
    %2464 = vmatmul.mubr.bf16.gmra.mxu0 %v1953
    %v2465 = vpop.f32.mrf.mxu0
    %v2466 = vadd.f32 %v2425, %v2465
    %v2467 = vpop.f32.mrf.mxu0
    %v2468 = vpop.f32.mrf.mxu0
    %v2469 = vadd.f32 %v2428, %v2468
    %v2470 = vpop.f32.mrf.mxu0
    %2471 = vdwg.mxu0
    %2472 = vmatprep.subr.bf16.mxu0 0
    %2473 = vmatpush1.bf16.msra.mxu0 %v2276
    %2474 = vmatprep.subr.bf16.mxu0 0
    %2475 = vmatpush1.bf16.msra.mxu0 %v2275
    %2476 = vmatprep.subr.bf16.mxu0 0
    %2477 = vmatpush1.bf16.msra.mxu0 %v2274
    %2478 = vmatprep.subr.bf16.mxu0 0
    %2479 = vmatpush1.bf16.msra.mxu0 %v2273
    %2480 = vmatprep.subr.bf16.mxu0 0
    %2481 = vmatpush1.bf16.msra.mxu0 %v2272
    %2482 = vmatprep.subr.bf16.mxu0 0
    %2483 = vmatpush1.bf16.msra.mxu0 %v2271
    %2484 = vmatprep.subr.bf16.mxu0 0
    %2485 = vmatpush1.bf16.msra.mxu0 %v2270
    %2486 = vmatprep.subr.bf16.mxu0 0
    %2487 = vmatpush1.bf16.msra.mxu0 %v2269
    %2488 = vmatprep.subr.bf16.mxu0 0
    %2489 = vmatpush2.bf16.msra.mxu0 %v2284
    %2490 = vmatprep.subr.bf16.mxu0 0
    %2491 = vmatpush2.bf16.msra.mxu0 %v2283
    %2492 = vmatprep.subr.bf16.mxu0 0
    %2493 = vmatpush2.bf16.msra.mxu0 %v2282
    %2494 = vmatprep.subr.bf16.mxu0 0
    %2495 = vmatpush2.bf16.msra.mxu0 %v2281
    %2496 = vmatprep.subr.bf16.mxu0 0
    %2497 = vmatpush2.bf16.msra.mxu0 %v2280
    %2498 = vmatprep.subr.bf16.mxu0 0
    %2499 = vmatpush2.bf16.msra.mxu0 %v2279
    %2500 = vmatprep.subr.bf16.mxu0 0
    %2501 = vmatpush2.bf16.msra.mxu0 %v2278
    %2502 = vmatprep.subr.bf16.mxu0 0
    %2503 = vmatpush2.bf16.msra.mxu0 %v2277
    %2504 = vmatprep.mubr.bf16.mxu0 %v1956
    %2505 = vmatmul.mubr.bf16.gmra.mxu0 %v1955
    %v2506 = vpop.f32.mrf.mxu0
    %v2507 = vadd.f32 %v2466, %v2506
    %v2508 = vpop.f32.mrf.mxu0
    %v2509 = vpop.f32.mrf.mxu0
    %v2510 = vadd.f32 %v2469, %v2509
    %v2511 = vpop.f32.mrf.mxu0
    %2512 = vdwg.mxu0
    %v2513 = vtanh.pop %v2507
    %v2514 = vtanh.pop %v2510
    %v2515 = vld [vmem:[#allocation2] sm:$0xff]
    %v2516 = vld [vmem:[#allocation2 + $0x8] sm:$0xff]
    %v2517 = vpack.c.bf16 %v2514, %v2513
    %v2518 = vld [vmem:[%s4] sm:$0xf]
    %v2519 = vld [vmem:[%s4 + $0x4] sm:$0xf]
    %v2520 = vld [vmem:[%s4 + $0x8] sm:$0xf]
    %v2521 = vld [vmem:[%s4 + $0xc] sm:$0xf]
    %v2522 = vld [vmem:[%s4 + $0x10] sm:$0xf]
    %v2523 = vld [vmem:[%s4 + $0x14] sm:$0xf]
    %v2524 = vld [vmem:[%s4 + $0x18] sm:$0xf]
    %v2525 = vld [vmem:[%s4 + $0x1c] sm:$0xf]
    %v2526 = vld [vmem:[%s4 + $0x20] sm:$0xf]
    %v2527 = vld [vmem:[%s4 + $0x24] sm:$0xf]
    %v2528 = vld [vmem:[%s4 + $0x28] sm:$0xf]
    %v2529 = vld [vmem:[%s4 + $0x2c] sm:$0xf]
    %v2530 = vld [vmem:[%s4 + $0x30] sm:$0xf]
    %v2531 = vld [vmem:[%s4 + $0x34] sm:$0xf]
    %v2532 = vld [vmem:[%s4 + $0x38] sm:$0xf]
    %v2533 = vld [vmem:[%s4 + $0x3c] sm:$0xf]
    %v2550 = vunpack.c.l.b16 %v2518
    %v2551 = vunpack.c.l.b16 %v2519
    %v2552 = vunpack.c.l.b16 %v2520
    %v2553 = vunpack.c.l.b16 %v2521
    %v2554 = vunpack.c.l.b16 %v2522
    %v2555 = vunpack.c.l.b16 %v2523
    %v2556 = vunpack.c.l.b16 %v2524
    %v2557 = vunpack.c.l.b16 %v2525
    %v2558 = vunpack.c.l.b16 %v2526
    %v2559 = vunpack.c.l.b16 %v2527
    %v2560 = vunpack.c.l.b16 %v2528
    %v2561 = vunpack.c.l.b16 %v2529
    %v2562 = vunpack.c.l.b16 %v2530
    %v2563 = vunpack.c.l.b16 %v2531
    %v2564 = vunpack.c.l.b16 %v2532
    %v2565 = vunpack.c.l.b16 %v2533
    %v2566 = vpack.c.b16 %v2551, %v2550
    %v2567 = vpack.c.b16 %v2553, %v2552
    %v2568 = vpack.c.b16 %v2555, %v2554
    %v2569 = vpack.c.b16 %v2557, %v2556
    %v2570 = vpack.c.b16 %v2559, %v2558
    %v2571 = vpack.c.b16 %v2561, %v2560
    %v2572 = vpack.c.b16 %v2563, %v2562
    %v2573 = vpack.c.b16 %v2565, %v2564
    %2582 = vmatprep.subr.bf16.mxu0 0
    %2583 = vmatpush1.bf16.msra.mxu0 %v2573
    %2584 = vmatprep.subr.bf16.mxu0 0
    %2585 = vmatpush1.bf16.msra.mxu0 %v2572
    %2586 = vmatprep.subr.bf16.mxu0 0
    %2587 = vmatpush1.bf16.msra.mxu0 %v2571
    %2588 = vmatprep.subr.bf16.mxu0 0
    %2589 = vmatpush1.bf16.msra.mxu0 %v2570
    %2590 = vmatprep.subr.bf16.mxu0 0
    %2591 = vmatpush1.bf16.msra.mxu0 %v2569
    %2592 = vmatprep.subr.bf16.mxu0 0
    %2593 = vmatpush1.bf16.msra.mxu0 %v2568
    %2594 = vmatprep.subr.bf16.mxu0 0
    %2595 = vmatpush1.bf16.msra.mxu0 %v2567
    %2596 = vmatprep.subr.bf16.mxu0 0
    %2597 = vmatpush1.bf16.msra.mxu0 %v2566
    %2598 = vmatprep.subr.bf16.mxu0 0
    %2599 = vmatpush2.bf16.msra.mxu0 0
    %2600 = vmatprep.subr.bf16.mxu0 0
    %2601 = vmatpush2.bf16.msra.mxu0 0
    %2602 = vmatprep.subr.bf16.mxu0 0
    %2603 = vmatpush2.bf16.msra.mxu0 0
    %2604 = vmatprep.subr.bf16.mxu0 0
    %2605 = vmatpush2.bf16.msra.mxu0 0
    %2606 = vmatprep.subr.bf16.mxu0 0
    %2607 = vmatpush2.bf16.msra.mxu0 0
    %2608 = vmatprep.subr.bf16.mxu0 0
    %2609 = vmatpush2.bf16.msra.mxu0 0
    %2610 = vmatprep.subr.bf16.mxu0 0
    %2611 = vmatpush2.bf16.msra.mxu0 0
    %2612 = vmatprep.subr.bf16.mxu0 0
    %2613 = vmatpush2.bf16.msra.mxu0 0
    %2614 = vmatprep.mubr.bf16.mxu0 0
    %2615 = vmatmul.mubr.bf16.gmra.mxu0 %v2517
    %v2616 = vpop.f32.mrf.mxu0
    %v2617 = vadd.f32 0.0, %v2616
    %v2618 = vpop.f32.mrf.mxu0
    %v2619 = vpop.f32.mrf.mxu0
    %v2620 = vadd.f32 0.0, %v2619
    %v2621 = vpop.f32.mrf.mxu0
    %2622 = vdwg.mxu0
    %v2623 = vadd.f32 %v2515, %v2617
    %v2624 = vadd.f32 %v2516, %v2620
    %2625 = vst [vmem:[#allocation2] sm:$0xff] %v2623
    %2626 = vst [vmem:[#allocation2 + $0x8] sm:$0xff] %v2624
    // Predicated region
    $region34: #{bilinear_classification_head.1} parent=1 // pred_check
      %p2627 = pneg %p39
    $region35: #{bilinear_classification_head.1} parent=1 // pred_check_branch
      %2629 = sbr.rel (%p2627) target = $region37
    $region36: #{bilinear_classification_head.1} parent=1 // pred_region
      %v2630 = vld [vmem:[#allocation2] sm:$0xff]
      %v2631 = vld [vmem:[#allocation2 + $0x8] sm:$0xff]
      %v2632 = vld [vmem:[%s5] sm:$0x1]
      %v2634 = vlaneseq
      %v2635 = vshrl.u32 %v2634, 7
      %v2636 = vsub.s32 0, %v2635
      %v2637 = vrot.slane %v2632, %v2636
      %v2639 = vadd.f32 %v2630, %v2637
      %v2640 = vadd.f32 %v2631, %v2637
      %2641 = vst [vmem:[#allocation7] sm:$0xff] %v2639
      %2642 = vst [vmem:[#allocation7 + $0x8] sm:$0xff] %v2640
    $region37: #{bilinear_classification_head.1} parent=1 // pred_fallthru
      _
    // Predicated region
    $region38: #{bilinear_classification_head.1} parent=1 // pred_check
      _
    $region39: #{bilinear_classification_head.1} parent=1 // pred_check_branch
      %2644 = sbr.rel (0) target = $region41
    $region40: #{bilinear_classification_head.1} parent=1 // pred_region
      %s2646 = ssub.s32 256, 256
      %2647 = vsyncadd [#allocation6], %s2646
      %s2648 = sshll.u32 [#allocation7], 4
      %s2649 = int_to_ptr.vmem [resolvable:$true] %s2648
      %2654 = dma.vmem_to_hbm [thread:$0]  %s2649, 256, %s6, [#allocation6], 128, 128, 8
    $region41: #{bilinear_classification_head.1} parent=1 // pred_fallthru
      _
    // Predicated region
    $region42: #{bilinear_classification_head.1} parent=1 // pred_check
      _
    $region43: #{bilinear_classification_head.1} parent=1 // pred_check_branch
      %2656 = sbr.rel (0) target = $region45
    $region44: #{bilinear_classification_head.1} parent=1 // pred_region
      %2657 = dma.done [#allocation6], 256
    $region45: #{bilinear_classification_head.1} parent=1 // pred_fallthru
      _
    %2658 = vsyncpa [#allocation5], 1
    %2659 = vsyncpa [#allocation6], 1

</llo_original>
